<compile_context>
chip_gen: v6e
topology: v6e:2x2x1
jax: 0.10.0
libtpu: 0.0.40
codegen_flags: <defaults>
</compile_context>

<pallas_src>
import functools

import jax
import jax.numpy as jnp
from jax.experimental import pallas as pl
from jax.experimental.pallas import tpu as pltpu


def _spatial_attention_kernel(x_ref, w_ref, o_ref,
                              sum_acc, max_acc, canv_a, canv_m,
                              *, n_channels, width, ksize, canvas_base):
    """One (batch-tile, channel-tile) grid step.

    x_ref  : (bt, Ct, HW)  input block (VMEM), HW on lanes (lane-dense)
    w_ref  : (2*k*k,)      conv weights in SMEM (first k*k: avg map, rest: max)
    o_ref  : (bt, 1, HW)   output block (lane-dense store)
    sum_acc, max_acc : (bt, HW) f32 running channel sum / max (scratch)
    canv_a, canv_m   : (bt, CL) f32 flat zero-padded conv canvases (scratch)
    """
    bt, _, HW = x_ref.shape
    pad = ksize // 2
    c_idx = pl.program_id(1)
    n_c = pl.num_programs(1)

    # ---- channel reduction (runs every grid step) ---------------------------
    @pl.when(c_idx == 0)
    def _init():
        sum_acc[...] = jnp.zeros(sum_acc.shape, sum_acc.dtype)
        max_acc[...] = jnp.full(max_acc.shape, -jnp.inf, max_acc.dtype)

    xv = x_ref[...]                                        # (bt, Ct, HW)
    # Sum accumulates in f32; max runs in the input dtype (bf16-native VPU on
    # v6e/v7x) and is widened once per block.
    sum_acc[...] += jnp.sum(xv.astype(jnp.float32), axis=1)
    max_acc[...] = jnp.maximum(max_acc[...],
                               jnp.max(xv, axis=1).astype(jnp.float32))

    # ---- conv + sigmoid + lane-dense store (last channel step only) ---------
    @pl.when(c_idx == n_c - 1)
    def _finish():
        W = width
        B = canvas_base
        avg = sum_acc[...] * (1.0 / n_channels)            # (bt, HW)
        mx = max_acc[...]

        # Flat zero-padded canvases: one full-plane zero store plus one
        # (128-aligned) interior store per plane; the zero regions provide the
        # conv's top/bottom padding.
        canv_a[...] = jnp.zeros(canv_a.shape, canv_a.dtype)
        canv_m[...] = jnp.zeros(canv_m.shape, canv_m.dtype)
        canv_a[:, B:B + HW] = avg
        canv_m[:, B:B + HW] = mx

        # Read the 2*k*k conv scalars once (1-D SMEM array).
        nt = ksize * ksize
        w = [w_ref[t] for t in range(2 * nt)]

        # For output position p = y*W + x, tap (ky, kx) of the zero-padded
        # plane lives at canvas[B + p + (ky-pad)*W + (kx-pad)].  Columns whose
        # x' = x + kx - pad falls outside [0, W) are zeroed by one lane mask
        # per kx (identical across ky), so there are only `ksize` selects.
        col = jax.lax.broadcasted_iota(jnp.int32, (bt, HW), 1) % W
        acc = jnp.zeros((bt, HW), jnp.float32)
        # TODO(synk): for very large bt*H*W, chunk this tap loop over lane
        # strips to bound vreg live ranges (compiler spills to VMEM otherwise).
        for kx in range(ksize):
            part = jnp.zeros((bt, HW), jnp.float32)
            for ky in range(ksize):
                t = ky * ksize + kx
                start = B + (ky - pad) * W + (kx - pad)
                part = part + w[t] * canv_a[:, start:start + HW] \
                            + w[nt + t] * canv_m[:, start:start + HW]
            ok = (col >= pad - kx) & (col < W + pad - kx)
            acc = acc + jnp.where(ok, part, 0.0)

        att = 1.0 / (1.0 + jnp.exp(-acc))                  # exact sigmoid
        o_ref[:, 0, :] = att.astype(o_ref.dtype)


def _round_up(x, m):
    return (x + m - 1) // m * m


def _pick_channel_tile(C):
    """Channel tile: divides C and is a multiple of 8 (or the whole of C)."""
    if C <= 64:
        return C
    for ct in (64, 56, 48, 40, 32, 24, 16, 8):
        if C % ct == 0:
            return ct
    return C                 # awkward C: fall back to a single channel block


def _vmem_bytes(bt, Ct, HW, CL, in_bytes, out_bytes):
    """Rough per-step VMEM footprint (lane/sublane padded, double-buffered)."""
    HWp = _round_up(HW, 128)
    CLp = _round_up(CL, 128)
    Ctp = _round_up(max(Ct, 1), 8)
    btp = _round_up(bt, 8)
    inp = 2 * bt * Ctp * HWp * in_bytes     # double-buffered input block
    out = 2 * bt * 8 * HWp * out_bytes      # double-buffered output block
    acc = 2 * btp * HWp * 4                 # sum + max accumulators
    canv = 2 * btp * CLp * 4                # two flat conv canvases
    return inp + out + acc + canv


def spatial_attention_forward(x, wconv, *, ksize=7, max_batch_tile=8):
    """SpatialAttention forward.

    x: (N, C, H, W), wconv: (1, 2, k, k) (PyTorch Conv2d(2, 1, k, bias=False)
    weight).  Returns the (N, 1, H, W) attention map (same dtype as x).
    """
    assert ksize in (3, 7), "kernel size must be 3 or 7"
    N, C, H, W = x.shape
    pad = ksize // 2
    HW = H * W

    # Flat padded-canvas geometry: plane data sits at lane offset B (rounded
    # to 128 so the interior store is unmasked); pad*W + pad zeros on each
    # side absorb every tap offset.
    B = _round_up(pad * W + pad, 128)
    CL = B + HW + pad * W + pad

    # Per-generation VMEM budget (v7x: 64 MiB/TC, v5e/v6e: 128 MiB); raise the
    # scoped limit above the 16/32 MiB defaults.
    try:
        cap = int(pltpu.get_tpu_info().vmem_capacity_bytes)
    except Exception:
        cap = 0
    if not cap or cap <= 0:
        cap = 64 * 1024 * 1024
    vmem_limit = int(cap * 0.80)
    budget = int(vmem_limit * 0.85)

    Ct = _pick_channel_tile(C)
    in_b = x.dtype.itemsize
    out_b = x.dtype.itemsize

    # >= 4 batch grid steps when possible (2 per TensorCore on v7x megacore),
    # never fewer than 2 when N >= 2, so DMA/compute overlap exists.
    if N >= 4:
        bt_cap = max(1, N // 4)
    else:
        bt_cap = max(1, N // 2)
    bt_cap = max(1, min(bt_cap, max_batch_tile))

    bt = 1
    for cand in range(bt_cap, 0, -1):
        if _vmem_bytes(cand, Ct, HW, CL, in_b, out_b) <= budget:
            bt = cand
            break

    xf = x.reshape(N, C, HW)                         # free: NCHW is HW-contig
    # Conv2d(2,1,k) weight -> 1-D SMEM array: [avg-map taps ; max-map taps].
    wflat = wconv.reshape(2 * ksize * ksize).astype(jnp.float32)

    kernel = functools.partial(
        _spatial_attention_kernel,
        n_channels=C, width=W, ksize=ksize, canvas_base=B)

    out_flat = pl.pallas_call(
        kernel,
        out_shape=jax.ShapeDtypeStruct((N, 1, HW), x.dtype),
        grid_spec=pltpu.PrefetchScalarGridSpec(
            num_scalar_prefetch=0,
            grid=(pl.cdiv(N, bt), C // Ct),          # C (reduction) axis last
            in_specs=[
                pl.BlockSpec((bt, Ct, HW), lambda n, c: (n, c, 0)),
                pl.BlockSpec(memory_space=pltpu.MemorySpace.SMEM),
            ],
            out_specs=pl.BlockSpec((bt, 1, HW), lambda n, c: (n, 0, 0)),
            scratch_shapes=[
                pltpu.VMEM((bt, HW), jnp.float32),   # running channel sum
                pltpu.VMEM((bt, HW), jnp.float32),   # running channel max
                pltpu.VMEM((bt, CL), jnp.float32),   # padded avg canvas
                pltpu.VMEM((bt, CL), jnp.float32),   # padded max canvas
            ],
        ),
        compiler_params=pltpu.CompilerParams(
            dimension_semantics=("parallel", "arbitrary"),
            vmem_limit_bytes=vmem_limit),
    )(xf, wflat)

    return out_flat.reshape(N, 1, H, W)


def spatial_attention_ref(x, wconv, *, ksize=7):
    """Pure-JAX reference mirroring the PyTorch forward (NCHW)."""
    pad = ksize // 2
    avg = jnp.mean(x, axis=1, keepdims=True)
    mx = jnp.max(x, axis=1, keepdims=True)
    maps = jnp.concatenate([avg, mx], axis=1)
    conv = jax.lax.conv_general_dilated(
        maps, wconv, window_strides=(1, 1),
        padding=[(pad, pad), (pad, pad)],
        dimension_numbers=("NCHW", "OIHW", "NCHW"))
    return jax.nn.sigmoid(conv)


if __name__ == "__main__":
    N, C, H, W = 2, 4, 16, 16
    ksize = 7

    key = jax.random.PRNGKey(0)
    k1, k2 = jax.random.split(key)
    x = jax.random.normal(k1, (N, C, H, W), jnp.float32)
    # Conv2d(2, 1, kernel_size=7, padding=3, bias=False) weight
    wconv = 0.05 * jax.random.normal(k2, (1, 2, ksize, ksize), jnp.float32)

    out = spatial_attention_forward(x, wconv, ksize=ksize)
    out = jax.block_until_ready(out)

    ref = spatial_attention_ref(x, wconv, ksize=ksize)
    assert out.shape == ref.shape == (N, 1, H, W)
    max_err = float(jnp.max(jnp.abs(out - ref)))
    if max_err > 1e-4:
        raise AssertionError(f"mismatch vs reference, max abs err = {max_err}")

    print("KERNEL_OK")
</pallas_src>

<mosaic_0001>
module attributes {stable_mosaic.version = 11 : i64} {
  func.func @_spatial_attention_kernel(%arg0: i32, %arg1: i32, %arg2: memref<1x4x256xf32, #tpu.memory_space<vmem>>, %arg3: memref<98xf32, #tpu.memory_space<smem>>, %arg4: memref<1x1x256xf32, #tpu.memory_space<vmem>>, %arg5: memref<1x256xf32, #tpu.memory_space<vmem>>, %arg6: memref<1x256xf32, #tpu.memory_space<vmem>>, %arg7: memref<1x435xf32, #tpu.memory_space<vmem>>, %arg8: memref<1x435xf32, #tpu.memory_space<vmem>>) attributes {dimension_semantics = [#tpu.dimension_semantics<parallel>, #tpu.dimension_semantics<arbitrary>], iteration_bounds = array<i64: 2, 1>, scalar_prefetch = 0 : i64, scratch_operands = 4 : i64, tpu.core_type = #tpu.core_type<tc>, window_params = [{transform_indices = @transform_0, window_bounds = array<i64: 1, 4, 256>}, {transform_indices = @transform_1, window_bounds = array<i64: 98>}, {transform_indices = @transform_2, window_bounds = array<i64: 1, 1, 256>}]} {
    %c0_i32 = arith.constant 0 : i32
    %0 = arith.cmpi eq, %arg1, %c0_i32 : i32
    %1 = arith.extui %0 : i1 to i32
    %c0_i32_0 = arith.constant 0 : i32
    %2 = arith.cmpi ne, %1, %c0_i32_0 : i32
    scf.if %2 {
      %cst_14 = arith.constant 0.000000e+00 : f32
      %15 = vector.broadcast %cst_14 : f32 to vector<1x256xf32>
      %c0_15 = arith.constant 0 : index
      %c0_16 = arith.constant 0 : index
      %16 = vector.load %arg5[%c0_15, %c0_16] : memref<1x256xf32, #tpu.memory_space<vmem>>, vector<1x256xf32>
      tpu.vector_store %arg5[%c0_15, %c0_16], %15 {strides = array<i32>} : memref<1x256xf32, #tpu.memory_space<vmem>>, vector<1x256xf32>,
      %cst_17 = arith.constant 0xFF800000 : f32
      %17 = vector.broadcast %cst_17 : f32 to vector<1x256xf32>
      %c0_18 = arith.constant 0 : index
      %c0_19 = arith.constant 0 : index
      %18 = vector.load %arg6[%c0_18, %c0_19] : memref<1x256xf32, #tpu.memory_space<vmem>>, vector<1x256xf32>
      tpu.vector_store %arg6[%c0_18, %c0_19], %17 {strides = array<i32>} : memref<1x256xf32, #tpu.memory_space<vmem>>, vector<1x256xf32>,
    } else {
    }
    %c0 = arith.constant 0 : index
    %c0_1 = arith.constant 0 : index
    %c0_2 = arith.constant 0 : index
    %3 = vector.load %arg2[%c0, %c0_1, %c0_2] : memref<1x4x256xf32, #tpu.memory_space<vmem>>, vector<1x4x256xf32>
    %c0_3 = arith.constant 0 : index
    %c0_4 = arith.constant 0 : index
    %4 = vector.load %arg5[%c0_3, %c0_4] : memref<1x256xf32, #tpu.memory_space<vmem>>, vector<1x256xf32>
    %cst = arith.constant dense<0.000000e+00> : vector<1x256xf32>
    %5 = vector.multi_reduction <add>, %3, %cst [1] : vector<1x4x256xf32> to vector<1x256xf32>
    %6 = arith.addf %4, %5 : vector<1x256xf32>
    %c0_5 = arith.constant 0 : index
    %c0_6 = arith.constant 0 : index
    %7 = vector.load %arg5[%c0_5, %c0_6] : memref<1x256xf32, #tpu.memory_space<vmem>>, vector<1x256xf32>
    tpu.vector_store %arg5[%c0_5, %c0_6], %6 {strides = array<i32>} : memref<1x256xf32, #tpu.memory_space<vmem>>, vector<1x256xf32>,
    %c0_7 = arith.constant 0 : index
    %c0_8 = arith.constant 0 : index
    %8 = vector.load %arg6[%c0_7, %c0_8] : memref<1x256xf32, #tpu.memory_space<vmem>>, vector<1x256xf32>
    %cst_9 = arith.constant dense<0xFF800000> : vector<1x256xf32>
    %9 = vector.multi_reduction <maximumf>, %3, %cst_9 [1] : vector<1x4x256xf32> to vector<1x256xf32>
    %10 = arith.maximumf %8, %9 : vector<1x256xf32>
    %c0_10 = arith.constant 0 : index
    %c0_11 = arith.constant 0 : index
    %11 = vector.load %arg6[%c0_10, %c0_11] : memref<1x256xf32, #tpu.memory_space<vmem>>, vector<1x256xf32>
    tpu.vector_store %arg6[%c0_10, %c0_11], %10 {strides = array<i32>} : memref<1x256xf32, #tpu.memory_space<vmem>>, vector<1x256xf32>,
    %c0_i32_12 = arith.constant 0 : i32
    %12 = arith.cmpi eq, %arg1, %c0_i32_12 : i32
    %13 = arith.extui %12 : i1 to i32
    %c0_i32_13 = arith.constant 0 : i32
    %14 = arith.cmpi ne, %13, %c0_i32_13 : i32
    scf.if %14 {
      %c0_14 = arith.constant 0 : index
      %c0_15 = arith.constant 0 : index
      %15 = vector.load %arg5[%c0_14, %c0_15] : memref<1x256xf32, #tpu.memory_space<vmem>>, vector<1x256xf32>
      %cst_16 = arith.constant 2.500000e-01 : f32
      %16 = vector.broadcast %cst_16 : f32 to vector<1x256xf32>
      %17 = arith.mulf %15, %16 : vector<1x256xf32>
      %c0_17 = arith.constant 0 : index
      %c0_18 = arith.constant 0 : index
      %18 = vector.load %arg6[%c0_17, %c0_18] : memref<1x256xf32, #tpu.memory_space<vmem>>, vector<1x256xf32>
      %cst_19 = arith.constant 0.000000e+00 : f32
      %19 = vector.broadcast %cst_19 : f32 to vector<1x435xf32>
      %c0_20 = arith.constant 0 : index
      %c0_21 = arith.constant 0 : index
      %20 = vector.load %arg7[%c0_20, %c0_21] : memref<1x435xf32, #tpu.memory_space<vmem>>, vector<1x435xf32>
      tpu.vector_store %arg7[%c0_20, %c0_21], %19 {strides = array<i32>} : memref<1x435xf32, #tpu.memory_space<vmem>>, vector<1x435xf32>,
      %cst_22 = arith.constant 0.000000e+00 : f32
      %21 = vector.broadcast %cst_22 : f32 to vector<1x435xf32>
      %c0_23 = arith.constant 0 : index
      %c0_24 = arith.constant 0 : index
      %22 = vector.load %arg8[%c0_23, %c0_24] : memref<1x435xf32, #tpu.memory_space<vmem>>, vector<1x435xf32>
      tpu.vector_store %arg8[%c0_23, %c0_24], %21 {strides = array<i32>} : memref<1x435xf32, #tpu.memory_space<vmem>>, vector<1x435xf32>,
      %c0_25 = arith.constant 0 : index
      %c128 = arith.constant 128 : index
      %23 = vector.load %arg7[%c0_25, %c128] : memref<1x435xf32, #tpu.memory_space<vmem>>, vector<1x256xf32>
      tpu.vector_store %arg7[%c0_25, %c128], %17 {strides = array<i32>} : memref<1x435xf32, #tpu.memory_space<vmem>>, vector<1x256xf32>,
      %c0_26 = arith.constant 0 : index
      %c128_27 = arith.constant 128 : index
      %24 = vector.load %arg8[%c0_26, %c128_27] : memref<1x435xf32, #tpu.memory_space<vmem>>, vector<1x256xf32>
      tpu.vector_store %arg8[%c0_26, %c128_27], %18 {strides = array<i32>} : memref<1x435xf32, #tpu.memory_space<vmem>>, vector<1x256xf32>,
      %c0_28 = arith.constant 0 : index
      %25 = memref.load %arg3[%c0_28] : memref<98xf32, #tpu.memory_space<smem>>
      %c1 = arith.constant 1 : index
      %26 = memref.load %arg3[%c1] : memref<98xf32, #tpu.memory_space<smem>>
      %c2 = arith.constant 2 : index
      %27 = memref.load %arg3[%c2] : memref<98xf32, #tpu.memory_space<smem>>
      %c3 = arith.constant 3 : index
      %28 = memref.load %arg3[%c3] : memref<98xf32, #tpu.memory_space<smem>>
      %c4 = arith.constant 4 : index
      %29 = memref.load %arg3[%c4] : memref<98xf32, #tpu.memory_space<smem>>
      %c5 = arith.constant 5 : index
      %30 = memref.load %arg3[%c5] : memref<98xf32, #tpu.memory_space<smem>>
      %c6 = arith.constant 6 : index
      %31 = memref.load %arg3[%c6] : memref<98xf32, #tpu.memory_space<smem>>
      %c7 = arith.constant 7 : index
      %32 = memref.load %arg3[%c7] : memref<98xf32, #tpu.memory_space<smem>>
      %c8 = arith.constant 8 : index
      %33 = memref.load %arg3[%c8] : memref<98xf32, #tpu.memory_space<smem>>
      %c9 = arith.constant 9 : index
      %34 = memref.load %arg3[%c9] : memref<98xf32, #tpu.memory_space<smem>>
      %c10 = arith.constant 10 : index
      %35 = memref.load %arg3[%c10] : memref<98xf32, #tpu.memory_space<smem>>
      %c11 = arith.constant 11 : index
      %36 = memref.load %arg3[%c11] : memref<98xf32, #tpu.memory_space<smem>>
      %c12 = arith.constant 12 : index
      %37 = memref.load %arg3[%c12] : memref<98xf32, #tpu.memory_space<smem>>
      %c13 = arith.constant 13 : index
      %38 = memref.load %arg3[%c13] : memref<98xf32, #tpu.memory_space<smem>>
      %c14 = arith.constant 14 : index
      %39 = memref.load %arg3[%c14] : memref<98xf32, #tpu.memory_space<smem>>
      %c15 = arith.constant 15 : index
      %40 = memref.load %arg3[%c15] : memref<98xf32, #tpu.memory_space<smem>>
      %c16 = arith.constant 16 : index
      %41 = memref.load %arg3[%c16] : memref<98xf32, #tpu.memory_space<smem>>
      %c17 = arith.constant 17 : index
      %42 = memref.load %arg3[%c17] : memref<98xf32, #tpu.memory_space<smem>>
      %c18 = arith.constant 18 : index
      %43 = memref.load %arg3[%c18] : memref<98xf32, #tpu.memory_space<smem>>
      %c19 = arith.constant 19 : index
      %44 = memref.load %arg3[%c19] : memref<98xf32, #tpu.memory_space<smem>>
      %c20 = arith.constant 20 : index
      %45 = memref.load %arg3[%c20] : memref<98xf32, #tpu.memory_space<smem>>
      %c21 = arith.constant 21 : index
      %46 = memref.load %arg3[%c21] : memref<98xf32, #tpu.memory_space<smem>>
      %c22 = arith.constant 22 : index
      %47 = memref.load %arg3[%c22] : memref<98xf32, #tpu.memory_space<smem>>
      %c23 = arith.constant 23 : index
      %48 = memref.load %arg3[%c23] : memref<98xf32, #tpu.memory_space<smem>>
      %c24 = arith.constant 24 : index
      %49 = memref.load %arg3[%c24] : memref<98xf32, #tpu.memory_space<smem>>
      %c25 = arith.constant 25 : index
      %50 = memref.load %arg3[%c25] : memref<98xf32, #tpu.memory_space<smem>>
      %c26 = arith.constant 26 : index
      %51 = memref.load %arg3[%c26] : memref<98xf32, #tpu.memory_space<smem>>
      %c27 = arith.constant 27 : index
      %52 = memref.load %arg3[%c27] : memref<98xf32, #tpu.memory_space<smem>>
      %c28 = arith.constant 28 : index
      %53 = memref.load %arg3[%c28] : memref<98xf32, #tpu.memory_space<smem>>
      %c29 = arith.constant 29 : index
      %54 = memref.load %arg3[%c29] : memref<98xf32, #tpu.memory_space<smem>>
      %c30 = arith.constant 30 : index
      %55 = memref.load %arg3[%c30] : memref<98xf32, #tpu.memory_space<smem>>
      %c31 = arith.constant 31 : index
      %56 = memref.load %arg3[%c31] : memref<98xf32, #tpu.memory_space<smem>>
      %c32 = arith.constant 32 : index
      %57 = memref.load %arg3[%c32] : memref<98xf32, #tpu.memory_space<smem>>
      %c33 = arith.constant 33 : index
      %58 = memref.load %arg3[%c33] : memref<98xf32, #tpu.memory_space<smem>>
      %c34 = arith.constant 34 : index
      %59 = memref.load %arg3[%c34] : memref<98xf32, #tpu.memory_space<smem>>
      %c35 = arith.constant 35 : index
      %60 = memref.load %arg3[%c35] : memref<98xf32, #tpu.memory_space<smem>>
      %c36 = arith.constant 36 : index
      %61 = memref.load %arg3[%c36] : memref<98xf32, #tpu.memory_space<smem>>
      %c37 = arith.constant 37 : index
      %62 = memref.load %arg3[%c37] : memref<98xf32, #tpu.memory_space<smem>>
      %c38 = arith.constant 38 : index
      %63 = memref.load %arg3[%c38] : memref<98xf32, #tpu.memory_space<smem>>
      %c39 = arith.constant 39 : index
      %64 = memref.load %arg3[%c39] : memref<98xf32, #tpu.memory_space<smem>>
      %c40 = arith.constant 40 : index
      %65 = memref.load %arg3[%c40] : memref<98xf32, #tpu.memory_space<smem>>
      %c41 = arith.constant 41 : index
      %66 = memref.load %arg3[%c41] : memref<98xf32, #tpu.memory_space<smem>>
      %c42 = arith.constant 42 : index
      %67 = memref.load %arg3[%c42] : memref<98xf32, #tpu.memory_space<smem>>
      %c43 = arith.constant 43 : index
      %68 = memref.load %arg3[%c43] : memref<98xf32, #tpu.memory_space<smem>>
      %c44 = arith.constant 44 : index
      %69 = memref.load %arg3[%c44] : memref<98xf32, #tpu.memory_space<smem>>
      %c45 = arith.constant 45 : index
      %70 = memref.load %arg3[%c45] : memref<98xf32, #tpu.memory_space<smem>>
      %c46 = arith.constant 46 : index
      %71 = memref.load %arg3[%c46] : memref<98xf32, #tpu.memory_space<smem>>
      %c47 = arith.constant 47 : index
      %72 = memref.load %arg3[%c47] : memref<98xf32, #tpu.memory_space<smem>>
      %c48 = arith.constant 48 : index
      %73 = memref.load %arg3[%c48] : memref<98xf32, #tpu.memory_space<smem>>
      %c49 = arith.constant 49 : index
      %74 = memref.load %arg3[%c49] : memref<98xf32, #tpu.memory_space<smem>>
      %c50 = arith.constant 50 : index
      %75 = memref.load %arg3[%c50] : memref<98xf32, #tpu.memory_space<smem>>
      %c51 = arith.constant 51 : index
      %76 = memref.load %arg3[%c51] : memref<98xf32, #tpu.memory_space<smem>>
      %c52 = arith.constant 52 : index
      %77 = memref.load %arg3[%c52] : memref<98xf32, #tpu.memory_space<smem>>
      %c53 = arith.constant 53 : index
      %78 = memref.load %arg3[%c53] : memref<98xf32, #tpu.memory_space<smem>>
      %c54 = arith.constant 54 : index
      %79 = memref.load %arg3[%c54] : memref<98xf32, #tpu.memory_space<smem>>
      %c55 = arith.constant 55 : index
      %80 = memref.load %arg3[%c55] : memref<98xf32, #tpu.memory_space<smem>>
      %c56 = arith.constant 56 : index
      %81 = memref.load %arg3[%c56] : memref<98xf32, #tpu.memory_space<smem>>
      %c57 = arith.constant 57 : index
      %82 = memref.load %arg3[%c57] : memref<98xf32, #tpu.memory_space<smem>>
      %c58 = arith.constant 58 : index
      %83 = memref.load %arg3[%c58] : memref<98xf32, #tpu.memory_space<smem>>
      %c59 = arith.constant 59 : index
      %84 = memref.load %arg3[%c59] : memref<98xf32, #tpu.memory_space<smem>>
      %c60 = arith.constant 60 : index
      %85 = memref.load %arg3[%c60] : memref<98xf32, #tpu.memory_space<smem>>
      %c61 = arith.constant 61 : index
      %86 = memref.load %arg3[%c61] : memref<98xf32, #tpu.memory_space<smem>>
      %c62 = arith.constant 62 : index
      %87 = memref.load %arg3[%c62] : memref<98xf32, #tpu.memory_space<smem>>
      %c63 = arith.constant 63 : index
      %88 = memref.load %arg3[%c63] : memref<98xf32, #tpu.memory_space<smem>>
      %c64 = arith.constant 64 : index
      %89 = memref.load %arg3[%c64] : memref<98xf32, #tpu.memory_space<smem>>
      %c65 = arith.constant 65 : index
      %90 = memref.load %arg3[%c65] : memref<98xf32, #tpu.memory_space<smem>>
      %c66 = arith.constant 66 : index
      %91 = memref.load %arg3[%c66] : memref<98xf32, #tpu.memory_space<smem>>
      %c67 = arith.constant 67 : index
      %92 = memref.load %arg3[%c67] : memref<98xf32, #tpu.memory_space<smem>>
      %c68 = arith.constant 68 : index
      %93 = memref.load %arg3[%c68] : memref<98xf32, #tpu.memory_space<smem>>
      %c69 = arith.constant 69 : index
      %94 = memref.load %arg3[%c69] : memref<98xf32, #tpu.memory_space<smem>>
      %c70 = arith.constant 70 : index
      %95 = memref.load %arg3[%c70] : memref<98xf32, #tpu.memory_space<smem>>
      %c71 = arith.constant 71 : index
      %96 = memref.load %arg3[%c71] : memref<98xf32, #tpu.memory_space<smem>>
      %c72 = arith.constant 72 : index
      %97 = memref.load %arg3[%c72] : memref<98xf32, #tpu.memory_space<smem>>
      %c73 = arith.constant 73 : index
      %98 = memref.load %arg3[%c73] : memref<98xf32, #tpu.memory_space<smem>>
      %c74 = arith.constant 74 : index
      %99 = memref.load %arg3[%c74] : memref<98xf32, #tpu.memory_space<smem>>
      %c75 = arith.constant 75 : index
      %100 = memref.load %arg3[%c75] : memref<98xf32, #tpu.memory_space<smem>>
      %c76 = arith.constant 76 : index
      %101 = memref.load %arg3[%c76] : memref<98xf32, #tpu.memory_space<smem>>
      %c77 = arith.constant 77 : index
      %102 = memref.load %arg3[%c77] : memref<98xf32, #tpu.memory_space<smem>>
      %c78 = arith.constant 78 : index
      %103 = memref.load %arg3[%c78] : memref<98xf32, #tpu.memory_space<smem>>
      %c79 = arith.constant 79 : index
      %104 = memref.load %arg3[%c79] : memref<98xf32, #tpu.memory_space<smem>>
      %c80 = arith.constant 80 : index
      %105 = memref.load %arg3[%c80] : memref<98xf32, #tpu.memory_space<smem>>
      %c81 = arith.constant 81 : index
      %106 = memref.load %arg3[%c81] : memref<98xf32, #tpu.memory_space<smem>>
      %c82 = arith.constant 82 : index
      %107 = memref.load %arg3[%c82] : memref<98xf32, #tpu.memory_space<smem>>
      %c83 = arith.constant 83 : index
      %108 = memref.load %arg3[%c83] : memref<98xf32, #tpu.memory_space<smem>>
      %c84 = arith.constant 84 : index
      %109 = memref.load %arg3[%c84] : memref<98xf32, #tpu.memory_space<smem>>
      %c85 = arith.constant 85 : index
      %110 = memref.load %arg3[%c85] : memref<98xf32, #tpu.memory_space<smem>>
      %c86 = arith.constant 86 : index
      %111 = memref.load %arg3[%c86] : memref<98xf32, #tpu.memory_space<smem>>
      %c87 = arith.constant 87 : index
      %112 = memref.load %arg3[%c87] : memref<98xf32, #tpu.memory_space<smem>>
      %c88 = arith.constant 88 : index
      %113 = memref.load %arg3[%c88] : memref<98xf32, #tpu.memory_space<smem>>
      %c89 = arith.constant 89 : index
      %114 = memref.load %arg3[%c89] : memref<98xf32, #tpu.memory_space<smem>>
      %c90 = arith.constant 90 : index
      %115 = memref.load %arg3[%c90] : memref<98xf32, #tpu.memory_space<smem>>
      %c91 = arith.constant 91 : index
      %116 = memref.load %arg3[%c91] : memref<98xf32, #tpu.memory_space<smem>>
      %c92 = arith.constant 92 : index
      %117 = memref.load %arg3[%c92] : memref<98xf32, #tpu.memory_space<smem>>
      %c93 = arith.constant 93 : index
      %118 = memref.load %arg3[%c93] : memref<98xf32, #tpu.memory_space<smem>>
      %c94 = arith.constant 94 : index
      %119 = memref.load %arg3[%c94] : memref<98xf32, #tpu.memory_space<smem>>
      %c95 = arith.constant 95 : index
      %120 = memref.load %arg3[%c95] : memref<98xf32, #tpu.memory_space<smem>>
      %c96 = arith.constant 96 : index
      %121 = memref.load %arg3[%c96] : memref<98xf32, #tpu.memory_space<smem>>
      %c97 = arith.constant 97 : index
      %122 = memref.load %arg3[%c97] : memref<98xf32, #tpu.memory_space<smem>>
      %123 = tpu.iota {dimensions = array<i32: 1>} : vector<1x256xi32>
      %c16_i32 = arith.constant 16 : i32
      %c0_i32_29 = arith.constant 0 : i32
      %124 = arith.cmpi eq, %c16_i32, %c0_i32_29 : i32
      %c1_i32 = arith.constant 1 : i32
      %125 = arith.select %124, %c1_i32, %c16_i32 : i32
      %126 = vector.broadcast %125 : i32 to vector<1x256xi32>
      %127 = arith.remsi %123, %126 : vector<1x256xi32>
      %c0_i32_30 = arith.constant 0 : i32
      %128 = vector.broadcast %c0_i32_30 : i32 to vector<1x256xi32>
      %129 = arith.cmpi ne, %127, %128 : vector<1x256xi32>
      %c0_i32_31 = arith.constant 0 : i32
      %130 = vector.broadcast %c0_i32_31 : i32 to vector<1x256xi32>
      %131 = arith.cmpi slt, %127, %130 : vector<1x256xi32>
      %c0_i32_32 = arith.constant 0 : i32
      %132 = arith.cmpi slt, %125, %c0_i32_32 : i32
      %133 = vector.broadcast %132 : i1 to vector<1x256xi1>
      %134 = vector.broadcast %133 : vector<1x256xi1> to vector<1x256xi1>
      %135 = arith.xori %131, %134 : vector<1x256xi1>
      %136 = arith.andi %135, %129 : vector<1x256xi1>
      %137 = vector.broadcast %125 : i32 to vector<1x256xi32>
      %138 = arith.addi %127, %137 : vector<1x256xi32>
      %139 = arith.select %136, %138, %127 : vector<1x256xi1>, vector<1x256xi32>
      %cst_33 = arith.constant 0.000000e+00 : f32
      %140 = vector.broadcast %cst_33 : f32 to vector<1x256xf32>
      %cst_34 = arith.constant 0.000000e+00 : f32
      %141 = vector.broadcast %cst_34 : f32 to vector<1x256xf32>
      %c0_35 = arith.constant 0 : index
      %c77_36 = arith.constant 77 : index
      %142 = vector.load %arg7[%c0_35, %c77_36] : memref<1x435xf32, #tpu.memory_space<vmem>>, vector<1x256xf32>
      %143 = vector.broadcast %25 : f32 to vector<1x256xf32>
      %144 = arith.mulf %143, %142 : vector<1x256xf32>
      %145 = arith.addf %141, %144 : vector<1x256xf32>
      %c0_37 = arith.constant 0 : index
      %c77_38 = arith.constant 77 : index
      %146 = vector.load %arg8[%c0_37, %c77_38] : memref<1x435xf32, #tpu.memory_space<vmem>>, vector<1x256xf32>
      %147 = vector.broadcast %74 : f32 to vector<1x256xf32>
      %148 = arith.mulf %147, %146 : vector<1x256xf32>
      %149 = arith.addf %145, %148 : vector<1x256xf32>
      %c0_39 = arith.constant 0 : index
      %c93_40 = arith.constant 93 : index
      %150 = vector.load %arg7[%c0_39, %c93_40] : memref<1x435xf32, #tpu.memory_space<vmem>>, vector<1x256xf32>
      %151 = vector.broadcast %32 : f32 to vector<1x256xf32>
      %152 = arith.mulf %151, %150 : vector<1x256xf32>
      %153 = arith.addf %149, %152 : vector<1x256xf32>
      %c0_41 = arith.constant 0 : index
      %c93_42 = arith.constant 93 : index
      %154 = vector.load %arg8[%c0_41, %c93_42] : memref<1x435xf32, #tpu.memory_space<vmem>>, vector<1x256xf32>
      %155 = vector.broadcast %81 : f32 to vector<1x256xf32>
      %156 = arith.mulf %155, %154 : vector<1x256xf32>
      %157 = arith.addf %153, %156 : vector<1x256xf32>
      %c0_43 = arith.constant 0 : index
      %c109 = arith.constant 109 : index
      %158 = vector.load %arg7[%c0_43, %c109] : memref<1x435xf32, #tpu.memory_space<vmem>>, vector<1x256xf32>
      %159 = vector.broadcast %39 : f32 to vector<1x256xf32>
      %160 = arith.mulf %159, %158 : vector<1x256xf32>
      %161 = arith.addf %157, %160 : vector<1x256xf32>
      %c0_44 = arith.constant 0 : index
      %c109_45 = arith.constant 109 : index
      %162 = vector.load %arg8[%c0_44, %c109_45] : memref<1x435xf32, #tpu.memory_space<vmem>>, vector<1x256xf32>
      %163 = vector.broadcast %88 : f32 to vector<1x256xf32>
      %164 = arith.mulf %163, %162 : vector<1x256xf32>
      %165 = arith.addf %161, %164 : vector<1x256xf32>
      %c0_46 = arith.constant 0 : index
      %c125 = arith.constant 125 : index
      %166 = vector.load %arg7[%c0_46, %c125] : memref<1x435xf32, #tpu.memory_space<vmem>>, vector<1x256xf32>
      %167 = vector.broadcast %46 : f32 to vector<1x256xf32>
      %168 = arith.mulf %167, %166 : vector<1x256xf32>
      %169 = arith.addf %165, %168 : vector<1x256xf32>
      %c0_47 = arith.constant 0 : index
      %c125_48 = arith.constant 125 : index
      %170 = vector.load %arg8[%c0_47, %c125_48] : memref<1x435xf32, #tpu.memory_space<vmem>>, vector<1x256xf32>
      %171 = vector.broadcast %95 : f32 to vector<1x256xf32>
      %172 = arith.mulf %171, %170 : vector<1x256xf32>
      %173 = arith.addf %169, %172 : vector<1x256xf32>
      %c0_49 = arith.constant 0 : index
      %c141 = arith.constant 141 : index
      %174 = vector.load %arg7[%c0_49, %c141] : memref<1x435xf32, #tpu.memory_space<vmem>>, vector<1x256xf32>
      %175 = vector.broadcast %53 : f32 to vector<1x256xf32>
      %176 = arith.mulf %175, %174 : vector<1x256xf32>
      %177 = arith.addf %173, %176 : vector<1x256xf32>
      %c0_50 = arith.constant 0 : index
      %c141_51 = arith.constant 141 : index
      %178 = vector.load %arg8[%c0_50, %c141_51] : memref<1x435xf32, #tpu.memory_space<vmem>>, vector<1x256xf32>
      %179 = vector.broadcast %102 : f32 to vector<1x256xf32>
      %180 = arith.mulf %179, %178 : vector<1x256xf32>
      %181 = arith.addf %177, %180 : vector<1x256xf32>
      %c0_52 = arith.constant 0 : index
      %c157 = arith.constant 157 : index
      %182 = vector.load %arg7[%c0_52, %c157] : memref<1x435xf32, #tpu.memory_space<vmem>>, vector<1x256xf32>
      %183 = vector.broadcast %60 : f32 to vector<1x256xf32>
      %184 = arith.mulf %183, %182 : vector<1x256xf32>
      %185 = arith.addf %181, %184 : vector<1x256xf32>
      %c0_53 = arith.constant 0 : index
      %c157_54 = arith.constant 157 : index
      %186 = vector.load %arg8[%c0_53, %c157_54] : memref<1x435xf32, #tpu.memory_space<vmem>>, vector<1x256xf32>
      %187 = vector.broadcast %109 : f32 to vector<1x256xf32>
      %188 = arith.mulf %187, %186 : vector<1x256xf32>
      %189 = arith.addf %185, %188 : vector<1x256xf32>
      %c0_55 = arith.constant 0 : index
      %c173 = arith.constant 173 : index
      %190 = vector.load %arg7[%c0_55, %c173] : memref<1x435xf32, #tpu.memory_space<vmem>>, vector<1x256xf32>
      %191 = vector.broadcast %67 : f32 to vector<1x256xf32>
      %192 = arith.mulf %191, %190 : vector<1x256xf32>
      %193 = arith.addf %189, %192 : vector<1x256xf32>
      %c0_56 = arith.constant 0 : index
      %c173_57 = arith.constant 173 : index
      %194 = vector.load %arg8[%c0_56, %c173_57] : memref<1x435xf32, #tpu.memory_space<vmem>>, vector<1x256xf32>
      %195 = vector.broadcast %116 : f32 to vector<1x256xf32>
      %196 = arith.mulf %195, %194 : vector<1x256xf32>
      %197 = arith.addf %193, %196 : vector<1x256xf32>
      %c3_i32 = arith.constant 3 : i32
      %198 = vector.broadcast %c3_i32 : i32 to vector<1x256xi32>
      %199 = arith.cmpi sge, %139, %198 : vector<1x256xi32>
      %c19_i32 = arith.constant 19 : i32
      %200 = vector.broadcast %c19_i32 : i32 to vector<1x256xi32>
      %201 = arith.cmpi slt, %139, %200 : vector<1x256xi32>
      %202 = arith.andi %199, %201 : vector<1x256xi1>
      %cst_58 = arith.constant 0.000000e+00 : f32
      %203 = vector.broadcast %cst_58 : f32 to vector<1x256xf32>
      %204 = arith.select %202, %197, %203 : vector<1x256xi1>, vector<1x256xf32>
      %205 = arith.addf %140, %204 : vector<1x256xf32>
      %cst_59 = arith.constant 0.000000e+00 : f32
      %206 = vector.broadcast %cst_59 : f32 to vector<1x256xf32>
      %c0_60 = arith.constant 0 : index
      %c78_61 = arith.constant 78 : index
      %207 = vector.load %arg7[%c0_60, %c78_61] : memref<1x435xf32, #tpu.memory_space<vmem>>, vector<1x256xf32>
      %208 = vector.broadcast %26 : f32 to vector<1x256xf32>
      %209 = arith.mulf %208, %207 : vector<1x256xf32>
      %210 = arith.addf %206, %209 : vector<1x256xf32>
      %c0_62 = arith.constant 0 : index
      %c78_63 = arith.constant 78 : index
      %211 = vector.load %arg8[%c0_62, %c78_63] : memref<1x435xf32, #tpu.memory_space<vmem>>, vector<1x256xf32>
      %212 = vector.broadcast %75 : f32 to vector<1x256xf32>
      %213 = arith.mulf %212, %211 : vector<1x256xf32>
      %214 = arith.addf %210, %213 : vector<1x256xf32>
      %c0_64 = arith.constant 0 : index
      %c94_65 = arith.constant 94 : index
      %215 = vector.load %arg7[%c0_64, %c94_65] : memref<1x435xf32, #tpu.memory_space<vmem>>, vector<1x256xf32>
      %216 = vector.broadcast %33 : f32 to vector<1x256xf32>
      %217 = arith.mulf %216, %215 : vector<1x256xf32>
      %218 = arith.addf %214, %217 : vector<1x256xf32>
      %c0_66 = arith.constant 0 : index
      %c94_67 = arith.constant 94 : index
      %219 = vector.load %arg8[%c0_66, %c94_67] : memref<1x435xf32, #tpu.memory_space<vmem>>, vector<1x256xf32>
      %220 = vector.broadcast %82 : f32 to vector<1x256xf32>
      %221 = arith.mulf %220, %219 : vector<1x256xf32>
      %222 = arith.addf %218, %221 : vector<1x256xf32>
      %c0_68 = arith.constant 0 : index
      %c110 = arith.constant 110 : index
      %223 = vector.load %arg7[%c0_68, %c110] : memref<1x435xf32, #tpu.memory_space<vmem>>, vector<1x256xf32>
      %224 = vector.broadcast %40 : f32 to vector<1x256xf32>
      %225 = arith.mulf %224, %223 : vector<1x256xf32>
      %226 = arith.addf %222, %225 : vector<1x256xf32>
      %c0_69 = arith.constant 0 : index
      %c110_70 = arith.constant 110 : index
      %227 = vector.load %arg8[%c0_69, %c110_70] : memref<1x435xf32, #tpu.memory_space<vmem>>, vector<1x256xf32>
      %228 = vector.broadcast %89 : f32 to vector<1x256xf32>
      %229 = arith.mulf %228, %227 : vector<1x256xf32>
      %230 = arith.addf %226, %229 : vector<1x256xf32>
      %c0_71 = arith.constant 0 : index
      %c126 = arith.constant 126 : index
      %231 = vector.load %arg7[%c0_71, %c126] : memref<1x435xf32, #tpu.memory_space<vmem>>, vector<1x256xf32>
      %232 = vector.broadcast %47 : f32 to vector<1x256xf32>
      %233 = arith.mulf %232, %231 : vector<1x256xf32>
      %234 = arith.addf %230, %233 : vector<1x256xf32>
      %c0_72 = arith.constant 0 : index
      %c126_73 = arith.constant 126 : index
      %235 = vector.load %arg8[%c0_72, %c126_73] : memref<1x435xf32, #tpu.memory_space<vmem>>, vector<1x256xf32>
      %236 = vector.broadcast %96 : f32 to vector<1x256xf32>
      %237 = arith.mulf %236, %235 : vector<1x256xf32>
      %238 = arith.addf %234, %237 : vector<1x256xf32>
      %c0_74 = arith.constant 0 : index
      %c142 = arith.constant 142 : index
      %239 = vector.load %arg7[%c0_74, %c142] : memref<1x435xf32, #tpu.memory_space<vmem>>, vector<1x256xf32>
      %240 = vector.broadcast %54 : f32 to vector<1x256xf32>
      %241 = arith.mulf %240, %239 : vector<1x256xf32>
      %242 = arith.addf %238, %241 : vector<1x256xf32>
      %c0_75 = arith.constant 0 : index
      %c142_76 = arith.constant 142 : index
      %243 = vector.load %arg8[%c0_75, %c142_76] : memref<1x435xf32, #tpu.memory_space<vmem>>, vector<1x256xf32>
      %244 = vector.broadcast %103 : f32 to vector<1x256xf32>
      %245 = arith.mulf %244, %243 : vector<1x256xf32>
      %246 = arith.addf %242, %245 : vector<1x256xf32>
      %c0_77 = arith.constant 0 : index
      %c158 = arith.constant 158 : index
      %247 = vector.load %arg7[%c0_77, %c158] : memref<1x435xf32, #tpu.memory_space<vmem>>, vector<1x256xf32>
      %248 = vector.broadcast %61 : f32 to vector<1x256xf32>
      %249 = arith.mulf %248, %247 : vector<1x256xf32>
      %250 = arith.addf %246, %249 : vector<1x256xf32>
      %c0_78 = arith.constant 0 : index
      %c158_79 = arith.constant 158 : index
      %251 = vector.load %arg8[%c0_78, %c158_79] : memref<1x435xf32, #tpu.memory_space<vmem>>, vector<1x256xf32>
      %252 = vector.broadcast %110 : f32 to vector<1x256xf32>
      %253 = arith.mulf %252, %251 : vector<1x256xf32>
      %254 = arith.addf %250, %253 : vector<1x256xf32>
      %c0_80 = arith.constant 0 : index
      %c174 = arith.constant 174 : index
      %255 = vector.load %arg7[%c0_80, %c174] : memref<1x435xf32, #tpu.memory_space<vmem>>, vector<1x256xf32>
      %256 = vector.broadcast %68 : f32 to vector<1x256xf32>
      %257 = arith.mulf %256, %255 : vector<1x256xf32>
      %258 = arith.addf %254, %257 : vector<1x256xf32>
      %c0_81 = arith.constant 0 : index
      %c174_82 = arith.constant 174 : index
      %259 = vector.load %arg8[%c0_81, %c174_82] : memref<1x435xf32, #tpu.memory_space<vmem>>, vector<1x256xf32>
      %260 = vector.broadcast %117 : f32 to vector<1x256xf32>
      %261 = arith.mulf %260, %259 : vector<1x256xf32>
      %262 = arith.addf %258, %261 : vector<1x256xf32>
      %c2_i32 = arith.constant 2 : i32
      %263 = vector.broadcast %c2_i32 : i32 to vector<1x256xi32>
      %264 = arith.cmpi sge, %139, %263 : vector<1x256xi32>
      %c18_i32 = arith.constant 18 : i32
      %265 = vector.broadcast %c18_i32 : i32 to vector<1x256xi32>
      %266 = arith.cmpi slt, %139, %265 : vector<1x256xi32>
      %267 = arith.andi %264, %266 : vector<1x256xi1>
      %cst_83 = arith.constant 0.000000e+00 : f32
      %268 = vector.broadcast %cst_83 : f32 to vector<1x256xf32>
      %269 = arith.select %267, %262, %268 : vector<1x256xi1>, vector<1x256xf32>
      %270 = arith.addf %205, %269 : vector<1x256xf32>
      %cst_84 = arith.constant 0.000000e+00 : f32
      %271 = vector.broadcast %cst_84 : f32 to vector<1x256xf32>
      %c0_85 = arith.constant 0 : index
      %c79_86 = arith.constant 79 : index
      %272 = vector.load %arg7[%c0_85, %c79_86] : memref<1x435xf32, #tpu.memory_space<vmem>>, vector<1x256xf32>
      %273 = vector.broadcast %27 : f32 to vector<1x256xf32>
      %274 = arith.mulf %273, %272 : vector<1x256xf32>
      %275 = arith.addf %271, %274 : vector<1x256xf32>
      %c0_87 = arith.constant 0 : index
      %c79_88 = arith.constant 79 : index
      %276 = vector.load %arg8[%c0_87, %c79_88] : memref<1x435xf32, #tpu.memory_space<vmem>>, vector<1x256xf32>
      %277 = vector.broadcast %76 : f32 to vector<1x256xf32>
      %278 = arith.mulf %277, %276 : vector<1x256xf32>
      %279 = arith.addf %275, %278 : vector<1x256xf32>
      %c0_89 = arith.constant 0 : index
      %c95_90 = arith.constant 95 : index
      %280 = vector.load %arg7[%c0_89, %c95_90] : memref<1x435xf32, #tpu.memory_space<vmem>>, vector<1x256xf32>
      %281 = vector.broadcast %34 : f32 to vector<1x256xf32>
      %282 = arith.mulf %281, %280 : vector<1x256xf32>
      %283 = arith.addf %279, %282 : vector<1x256xf32>
      %c0_91 = arith.constant 0 : index
      %c95_92 = arith.constant 95 : index
      %284 = vector.load %arg8[%c0_91, %c95_92] : memref<1x435xf32, #tpu.memory_space<vmem>>, vector<1x256xf32>
      %285 = vector.broadcast %83 : f32 to vector<1x256xf32>
      %286 = arith.mulf %285, %284 : vector<1x256xf32>
      %287 = arith.addf %283, %286 : vector<1x256xf32>
      %c0_93 = arith.constant 0 : index
      %c111 = arith.constant 111 : index
      %288 = vector.load %arg7[%c0_93, %c111] : memref<1x435xf32, #tpu.memory_space<vmem>>, vector<1x256xf32>
      %289 = vector.broadcast %41 : f32 to vector<1x256xf32>
      %290 = arith.mulf %289, %288 : vector<1x256xf32>
      %291 = arith.addf %287, %290 : vector<1x256xf32>
      %c0_94 = arith.constant 0 : index
      %c111_95 = arith.constant 111 : index
      %292 = vector.load %arg8[%c0_94, %c111_95] : memref<1x435xf32, #tpu.memory_space<vmem>>, vector<1x256xf32>
      %293 = vector.broadcast %90 : f32 to vector<1x256xf32>
      %294 = arith.mulf %293, %292 : vector<1x256xf32>
      %295 = arith.addf %291, %294 : vector<1x256xf32>
      %c0_96 = arith.constant 0 : index
      %c127 = arith.constant 127 : index
      %296 = vector.load %arg7[%c0_96, %c127] : memref<1x435xf32, #tpu.memory_space<vmem>>, vector<1x256xf32>
      %297 = vector.broadcast %48 : f32 to vector<1x256xf32>
      %298 = arith.mulf %297, %296 : vector<1x256xf32>
      %299 = arith.addf %295, %298 : vector<1x256xf32>
      %c0_97 = arith.constant 0 : index
      %c127_98 = arith.constant 127 : index
      %300 = vector.load %arg8[%c0_97, %c127_98] : memref<1x435xf32, #tpu.memory_space<vmem>>, vector<1x256xf32>
      %301 = vector.broadcast %97 : f32 to vector<1x256xf32>
      %302 = arith.mulf %301, %300 : vector<1x256xf32>
      %303 = arith.addf %299, %302 : vector<1x256xf32>
      %c0_99 = arith.constant 0 : index
      %c143 = arith.constant 143 : index
      %304 = vector.load %arg7[%c0_99, %c143] : memref<1x435xf32, #tpu.memory_space<vmem>>, vector<1x256xf32>
      %305 = vector.broadcast %55 : f32 to vector<1x256xf32>
      %306 = arith.mulf %305, %304 : vector<1x256xf32>
      %307 = arith.addf %303, %306 : vector<1x256xf32>
      %c0_100 = arith.constant 0 : index
      %c143_101 = arith.constant 143 : index
      %308 = vector.load %arg8[%c0_100, %c143_101] : memref<1x435xf32, #tpu.memory_space<vmem>>, vector<1x256xf32>
      %309 = vector.broadcast %104 : f32 to vector<1x256xf32>
      %310 = arith.mulf %309, %308 : vector<1x256xf32>
      %311 = arith.addf %307, %310 : vector<1x256xf32>
      %c0_102 = arith.constant 0 : index
      %c159 = arith.constant 159 : index
      %312 = vector.load %arg7[%c0_102, %c159] : memref<1x435xf32, #tpu.memory_space<vmem>>, vector<1x256xf32>
      %313 = vector.broadcast %62 : f32 to vector<1x256xf32>
      %314 = arith.mulf %313, %312 : vector<1x256xf32>
      %315 = arith.addf %311, %314 : vector<1x256xf32>
      %c0_103 = arith.constant 0 : index
      %c159_104 = arith.constant 159 : index
      %316 = vector.load %arg8[%c0_103, %c159_104] : memref<1x435xf32, #tpu.memory_space<vmem>>, vector<1x256xf32>
      %317 = vector.broadcast %111 : f32 to vector<1x256xf32>
      %318 = arith.mulf %317, %316 : vector<1x256xf32>
      %319 = arith.addf %315, %318 : vector<1x256xf32>
      %c0_105 = arith.constant 0 : index
      %c175 = arith.constant 175 : index
      %320 = vector.load %arg7[%c0_105, %c175] : memref<1x435xf32, #tpu.memory_space<vmem>>, vector<1x256xf32>
      %321 = vector.broadcast %69 : f32 to vector<1x256xf32>
      %322 = arith.mulf %321, %320 : vector<1x256xf32>
      %323 = arith.addf %319, %322 : vector<1x256xf32>
      %c0_106 = arith.constant 0 : index
      %c175_107 = arith.constant 175 : index
      %324 = vector.load %arg8[%c0_106, %c175_107] : memref<1x435xf32, #tpu.memory_space<vmem>>, vector<1x256xf32>
      %325 = vector.broadcast %118 : f32 to vector<1x256xf32>
      %326 = arith.mulf %325, %324 : vector<1x256xf32>
      %327 = arith.addf %323, %326 : vector<1x256xf32>
      %c1_i32_108 = arith.constant 1 : i32
      %328 = vector.broadcast %c1_i32_108 : i32 to vector<1x256xi32>
      %329 = arith.cmpi sge, %139, %328 : vector<1x256xi32>
      %c17_i32 = arith.constant 17 : i32
      %330 = vector.broadcast %c17_i32 : i32 to vector<1x256xi32>
      %331 = arith.cmpi slt, %139, %330 : vector<1x256xi32>
      %332 = arith.andi %329, %331 : vector<1x256xi1>
      %cst_109 = arith.constant 0.000000e+00 : f32
      %333 = vector.broadcast %cst_109 : f32 to vector<1x256xf32>
      %334 = arith.select %332, %327, %333 : vector<1x256xi1>, vector<1x256xf32>
      %335 = arith.addf %270, %334 : vector<1x256xf32>
      %cst_110 = arith.constant 0.000000e+00 : f32
      %336 = vector.broadcast %cst_110 : f32 to vector<1x256xf32>
      %c0_111 = arith.constant 0 : index
      %c80_112 = arith.constant 80 : index
      %337 = vector.load %arg7[%c0_111, %c80_112] : memref<1x435xf32, #tpu.memory_space<vmem>>, vector<1x256xf32>
      %338 = vector.broadcast %28 : f32 to vector<1x256xf32>
      %339 = arith.mulf %338, %337 : vector<1x256xf32>
      %340 = arith.addf %336, %339 : vector<1x256xf32>
      %c0_113 = arith.constant 0 : index
      %c80_114 = arith.constant 80 : index
      %341 = vector.load %arg8[%c0_113, %c80_114] : memref<1x435xf32, #tpu.memory_space<vmem>>, vector<1x256xf32>
      %342 = vector.broadcast %77 : f32 to vector<1x256xf32>
      %343 = arith.mulf %342, %341 : vector<1x256xf32>
      %344 = arith.addf %340, %343 : vector<1x256xf32>
      %c0_115 = arith.constant 0 : index
      %c96_116 = arith.constant 96 : index
      %345 = vector.load %arg7[%c0_115, %c96_116] : memref<1x435xf32, #tpu.memory_space<vmem>>, vector<1x256xf32>
      %346 = vector.broadcast %35 : f32 to vector<1x256xf32>
      %347 = arith.mulf %346, %345 : vector<1x256xf32>
      %348 = arith.addf %344, %347 : vector<1x256xf32>
      %c0_117 = arith.constant 0 : index
      %c96_118 = arith.constant 96 : index
      %349 = vector.load %arg8[%c0_117, %c96_118] : memref<1x435xf32, #tpu.memory_space<vmem>>, vector<1x256xf32>
      %350 = vector.broadcast %84 : f32 to vector<1x256xf32>
      %351 = arith.mulf %350, %349 : vector<1x256xf32>
      %352 = arith.addf %348, %351 : vector<1x256xf32>
      %c0_119 = arith.constant 0 : index
      %c112 = arith.constant 112 : index
      %353 = vector.load %arg7[%c0_119, %c112] : memref<1x435xf32, #tpu.memory_space<vmem>>, vector<1x256xf32>
      %354 = vector.broadcast %42 : f32 to vector<1x256xf32>
      %355 = arith.mulf %354, %353 : vector<1x256xf32>
      %356 = arith.addf %352, %355 : vector<1x256xf32>
      %c0_120 = arith.constant 0 : index
      %c112_121 = arith.constant 112 : index
      %357 = vector.load %arg8[%c0_120, %c112_121] : memref<1x435xf32, #tpu.memory_space<vmem>>, vector<1x256xf32>
      %358 = vector.broadcast %91 : f32 to vector<1x256xf32>
      %359 = arith.mulf %358, %357 : vector<1x256xf32>
      %360 = arith.addf %356, %359 : vector<1x256xf32>
      %c0_122 = arith.constant 0 : index
      %c128_123 = arith.constant 128 : index
      %361 = vector.load %arg7[%c0_122, %c128_123] : memref<1x435xf32, #tpu.memory_space<vmem>>, vector<1x256xf32>
      %362 = vector.broadcast %49 : f32 to vector<1x256xf32>
      %363 = arith.mulf %362, %361 : vector<1x256xf32>
      %364 = arith.addf %360, %363 : vector<1x256xf32>
      %c0_124 = arith.constant 0 : index
      %c128_125 = arith.constant 128 : index
      %365 = vector.load %arg8[%c0_124, %c128_125] : memref<1x435xf32, #tpu.memory_space<vmem>>, vector<1x256xf32>
      %366 = vector.broadcast %98 : f32 to vector<1x256xf32>
      %367 = arith.mulf %366, %365 : vector<1x256xf32>
      %368 = arith.addf %364, %367 : vector<1x256xf32>
      %c0_126 = arith.constant 0 : index
      %c144 = arith.constant 144 : index
      %369 = vector.load %arg7[%c0_126, %c144] : memref<1x435xf32, #tpu.memory_space<vmem>>, vector<1x256xf32>
      %370 = vector.broadcast %56 : f32 to vector<1x256xf32>
      %371 = arith.mulf %370, %369 : vector<1x256xf32>
      %372 = arith.addf %368, %371 : vector<1x256xf32>
      %c0_127 = arith.constant 0 : index
      %c144_128 = arith.constant 144 : index
      %373 = vector.load %arg8[%c0_127, %c144_128] : memref<1x435xf32, #tpu.memory_space<vmem>>, vector<1x256xf32>
      %374 = vector.broadcast %105 : f32 to vector<1x256xf32>
      %375 = arith.mulf %374, %373 : vector<1x256xf32>
      %376 = arith.addf %372, %375 : vector<1x256xf32>
      %c0_129 = arith.constant 0 : index
      %c160 = arith.constant 160 : index
      %377 = vector.load %arg7[%c0_129, %c160] : memref<1x435xf32, #tpu.memory_space<vmem>>, vector<1x256xf32>
      %378 = vector.broadcast %63 : f32 to vector<1x256xf32>
      %379 = arith.mulf %378, %377 : vector<1x256xf32>
      %380 = arith.addf %376, %379 : vector<1x256xf32>
      %c0_130 = arith.constant 0 : index
      %c160_131 = arith.constant 160 : index
      %381 = vector.load %arg8[%c0_130, %c160_131] : memref<1x435xf32, #tpu.memory_space<vmem>>, vector<1x256xf32>
      %382 = vector.broadcast %112 : f32 to vector<1x256xf32>
      %383 = arith.mulf %382, %381 : vector<1x256xf32>
      %384 = arith.addf %380, %383 : vector<1x256xf32>
      %c0_132 = arith.constant 0 : index
      %c176 = arith.constant 176 : index
      %385 = vector.load %arg7[%c0_132, %c176] : memref<1x435xf32, #tpu.memory_space<vmem>>, vector<1x256xf32>
      %386 = vector.broadcast %70 : f32 to vector<1x256xf32>
      %387 = arith.mulf %386, %385 : vector<1x256xf32>
      %388 = arith.addf %384, %387 : vector<1x256xf32>
      %c0_133 = arith.constant 0 : index
      %c176_134 = arith.constant 176 : index
      %389 = vector.load %arg8[%c0_133, %c176_134] : memref<1x435xf32, #tpu.memory_space<vmem>>, vector<1x256xf32>
      %390 = vector.broadcast %119 : f32 to vector<1x256xf32>
      %391 = arith.mulf %390, %389 : vector<1x256xf32>
      %392 = arith.addf %388, %391 : vector<1x256xf32>
      %c0_i32_135 = arith.constant 0 : i32
      %393 = vector.broadcast %c0_i32_135 : i32 to vector<1x256xi32>
      %394 = arith.cmpi sge, %139, %393 : vector<1x256xi32>
      %c16_i32_136 = arith.constant 16 : i32
      %395 = vector.broadcast %c16_i32_136 : i32 to vector<1x256xi32>
      %396 = arith.cmpi slt, %139, %395 : vector<1x256xi32>
      %397 = arith.andi %394, %396 : vector<1x256xi1>
      %cst_137 = arith.constant 0.000000e+00 : f32
      %398 = vector.broadcast %cst_137 : f32 to vector<1x256xf32>
      %399 = arith.select %397, %392, %398 : vector<1x256xi1>, vector<1x256xf32>
      %400 = arith.addf %335, %399 : vector<1x256xf32>
      %cst_138 = arith.constant 0.000000e+00 : f32
      %401 = vector.broadcast %cst_138 : f32 to vector<1x256xf32>
      %c0_139 = arith.constant 0 : index
      %c81_140 = arith.constant 81 : index
      %402 = vector.load %arg7[%c0_139, %c81_140] : memref<1x435xf32, #tpu.memory_space<vmem>>, vector<1x256xf32>
      %403 = vector.broadcast %29 : f32 to vector<1x256xf32>
      %404 = arith.mulf %403, %402 : vector<1x256xf32>
      %405 = arith.addf %401, %404 : vector<1x256xf32>
      %c0_141 = arith.constant 0 : index
      %c81_142 = arith.constant 81 : index
      %406 = vector.load %arg8[%c0_141, %c81_142] : memref<1x435xf32, #tpu.memory_space<vmem>>, vector<1x256xf32>
      %407 = vector.broadcast %78 : f32 to vector<1x256xf32>
      %408 = arith.mulf %407, %406 : vector<1x256xf32>
      %409 = arith.addf %405, %408 : vector<1x256xf32>
      %c0_143 = arith.constant 0 : index
      %c97_144 = arith.constant 97 : index
      %410 = vector.load %arg7[%c0_143, %c97_144] : memref<1x435xf32, #tpu.memory_space<vmem>>, vector<1x256xf32>
      %411 = vector.broadcast %36 : f32 to vector<1x256xf32>
      %412 = arith.mulf %411, %410 : vector<1x256xf32>
      %413 = arith.addf %409, %412 : vector<1x256xf32>
      %c0_145 = arith.constant 0 : index
      %c97_146 = arith.constant 97 : index
      %414 = vector.load %arg8[%c0_145, %c97_146] : memref<1x435xf32, #tpu.memory_space<vmem>>, vector<1x256xf32>
      %415 = vector.broadcast %85 : f32 to vector<1x256xf32>
      %416 = arith.mulf %415, %414 : vector<1x256xf32>
      %417 = arith.addf %413, %416 : vector<1x256xf32>
      %c0_147 = arith.constant 0 : index
      %c113 = arith.constant 113 : index
      %418 = vector.load %arg7[%c0_147, %c113] : memref<1x435xf32, #tpu.memory_space<vmem>>, vector<1x256xf32>
      %419 = vector.broadcast %43 : f32 to vector<1x256xf32>
      %420 = arith.mulf %419, %418 : vector<1x256xf32>
      %421 = arith.addf %417, %420 : vector<1x256xf32>
      %c0_148 = arith.constant 0 : index
      %c113_149 = arith.constant 113 : index
      %422 = vector.load %arg8[%c0_148, %c113_149] : memref<1x435xf32, #tpu.memory_space<vmem>>, vector<1x256xf32>
      %423 = vector.broadcast %92 : f32 to vector<1x256xf32>
      %424 = arith.mulf %423, %422 : vector<1x256xf32>
      %425 = arith.addf %421, %424 : vector<1x256xf32>
      %c0_150 = arith.constant 0 : index
      %c129 = arith.constant 129 : index
      %426 = vector.load %arg7[%c0_150, %c129] : memref<1x435xf32, #tpu.memory_space<vmem>>, vector<1x256xf32>
      %427 = vector.broadcast %50 : f32 to vector<1x256xf32>
      %428 = arith.mulf %427, %426 : vector<1x256xf32>
      %429 = arith.addf %425, %428 : vector<1x256xf32>
      %c0_151 = arith.constant 0 : index
      %c129_152 = arith.constant 129 : index
      %430 = vector.load %arg8[%c0_151, %c129_152] : memref<1x435xf32, #tpu.memory_space<vmem>>, vector<1x256xf32>
      %431 = vector.broadcast %99 : f32 to vector<1x256xf32>
      %432 = arith.mulf %431, %430 : vector<1x256xf32>
      %433 = arith.addf %429, %432 : vector<1x256xf32>
      %c0_153 = arith.constant 0 : index
      %c145 = arith.constant 145 : index
      %434 = vector.load %arg7[%c0_153, %c145] : memref<1x435xf32, #tpu.memory_space<vmem>>, vector<1x256xf32>
      %435 = vector.broadcast %57 : f32 to vector<1x256xf32>
      %436 = arith.mulf %435, %434 : vector<1x256xf32>
      %437 = arith.addf %433, %436 : vector<1x256xf32>
      %c0_154 = arith.constant 0 : index
      %c145_155 = arith.constant 145 : index
      %438 = vector.load %arg8[%c0_154, %c145_155] : memref<1x435xf32, #tpu.memory_space<vmem>>, vector<1x256xf32>
      %439 = vector.broadcast %106 : f32 to vector<1x256xf32>
      %440 = arith.mulf %439, %438 : vector<1x256xf32>
      %441 = arith.addf %437, %440 : vector<1x256xf32>
      %c0_156 = arith.constant 0 : index
      %c161 = arith.constant 161 : index
      %442 = vector.load %arg7[%c0_156, %c161] : memref<1x435xf32, #tpu.memory_space<vmem>>, vector<1x256xf32>
      %443 = vector.broadcast %64 : f32 to vector<1x256xf32>
      %444 = arith.mulf %443, %442 : vector<1x256xf32>
      %445 = arith.addf %441, %444 : vector<1x256xf32>
      %c0_157 = arith.constant 0 : index
      %c161_158 = arith.constant 161 : index
      %446 = vector.load %arg8[%c0_157, %c161_158] : memref<1x435xf32, #tpu.memory_space<vmem>>, vector<1x256xf32>
      %447 = vector.broadcast %113 : f32 to vector<1x256xf32>
      %448 = arith.mulf %447, %446 : vector<1x256xf32>
      %449 = arith.addf %445, %448 : vector<1x256xf32>
      %c0_159 = arith.constant 0 : index
      %c177 = arith.constant 177 : index
      %450 = vector.load %arg7[%c0_159, %c177] : memref<1x435xf32, #tpu.memory_space<vmem>>, vector<1x256xf32>
      %451 = vector.broadcast %71 : f32 to vector<1x256xf32>
      %452 = arith.mulf %451, %450 : vector<1x256xf32>
      %453 = arith.addf %449, %452 : vector<1x256xf32>
      %c0_160 = arith.constant 0 : index
      %c177_161 = arith.constant 177 : index
      %454 = vector.load %arg8[%c0_160, %c177_161] : memref<1x435xf32, #tpu.memory_space<vmem>>, vector<1x256xf32>
      %455 = vector.broadcast %120 : f32 to vector<1x256xf32>
      %456 = arith.mulf %455, %454 : vector<1x256xf32>
      %457 = arith.addf %453, %456 : vector<1x256xf32>
      %c-1_i32 = arith.constant -1 : i32
      %458 = vector.broadcast %c-1_i32 : i32 to vector<1x256xi32>
      %459 = arith.cmpi sge, %139, %458 : vector<1x256xi32>
      %c15_i32 = arith.constant 15 : i32
      %460 = vector.broadcast %c15_i32 : i32 to vector<1x256xi32>
      %461 = arith.cmpi slt, %139, %460 : vector<1x256xi32>
      %462 = arith.andi %459, %461 : vector<1x256xi1>
      %cst_162 = arith.constant 0.000000e+00 : f32
      %463 = vector.broadcast %cst_162 : f32 to vector<1x256xf32>
      %464 = arith.select %462, %457, %463 : vector<1x256xi1>, vector<1x256xf32>
      %465 = arith.addf %400, %464 : vector<1x256xf32>
      %cst_163 = arith.constant 0.000000e+00 : f32
      %466 = vector.broadcast %cst_163 : f32 to vector<1x256xf32>
      %c0_164 = arith.constant 0 : index
      %c82_165 = arith.constant 82 : index
      %467 = vector.load %arg7[%c0_164, %c82_165] : memref<1x435xf32, #tpu.memory_space<vmem>>, vector<1x256xf32>
      %468 = vector.broadcast %30 : f32 to vector<1x256xf32>
      %469 = arith.mulf %468, %467 : vector<1x256xf32>
      %470 = arith.addf %466, %469 : vector<1x256xf32>
      %c0_166 = arith.constant 0 : index
      %c82_167 = arith.constant 82 : index
      %471 = vector.load %arg8[%c0_166, %c82_167] : memref<1x435xf32, #tpu.memory_space<vmem>>, vector<1x256xf32>
      %472 = vector.broadcast %79 : f32 to vector<1x256xf32>
      %473 = arith.mulf %472, %471 : vector<1x256xf32>
      %474 = arith.addf %470, %473 : vector<1x256xf32>
      %c0_168 = arith.constant 0 : index
      %c98 = arith.constant 98 : index
      %475 = vector.load %arg7[%c0_168, %c98] : memref<1x435xf32, #tpu.memory_space<vmem>>, vector<1x256xf32>
      %476 = vector.broadcast %37 : f32 to vector<1x256xf32>
      %477 = arith.mulf %476, %475 : vector<1x256xf32>
      %478 = arith.addf %474, %477 : vector<1x256xf32>
      %c0_169 = arith.constant 0 : index
      %c98_170 = arith.constant 98 : index
      %479 = vector.load %arg8[%c0_169, %c98_170] : memref<1x435xf32, #tpu.memory_space<vmem>>, vector<1x256xf32>
      %480 = vector.broadcast %86 : f32 to vector<1x256xf32>
      %481 = arith.mulf %480, %479 : vector<1x256xf32>
      %482 = arith.addf %478, %481 : vector<1x256xf32>
      %c0_171 = arith.constant 0 : index
      %c114 = arith.constant 114 : index
      %483 = vector.load %arg7[%c0_171, %c114] : memref<1x435xf32, #tpu.memory_space<vmem>>, vector<1x256xf32>
      %484 = vector.broadcast %44 : f32 to vector<1x256xf32>
      %485 = arith.mulf %484, %483 : vector<1x256xf32>
      %486 = arith.addf %482, %485 : vector<1x256xf32>
      %c0_172 = arith.constant 0 : index
      %c114_173 = arith.constant 114 : index
      %487 = vector.load %arg8[%c0_172, %c114_173] : memref<1x435xf32, #tpu.memory_space<vmem>>, vector<1x256xf32>
      %488 = vector.broadcast %93 : f32 to vector<1x256xf32>
      %489 = arith.mulf %488, %487 : vector<1x256xf32>
      %490 = arith.addf %486, %489 : vector<1x256xf32>
      %c0_174 = arith.constant 0 : index
      %c130 = arith.constant 130 : index
      %491 = vector.load %arg7[%c0_174, %c130] : memref<1x435xf32, #tpu.memory_space<vmem>>, vector<1x256xf32>
      %492 = vector.broadcast %51 : f32 to vector<1x256xf32>
      %493 = arith.mulf %492, %491 : vector<1x256xf32>
      %494 = arith.addf %490, %493 : vector<1x256xf32>
      %c0_175 = arith.constant 0 : index
      %c130_176 = arith.constant 130 : index
      %495 = vector.load %arg8[%c0_175, %c130_176] : memref<1x435xf32, #tpu.memory_space<vmem>>, vector<1x256xf32>
      %496 = vector.broadcast %100 : f32 to vector<1x256xf32>
      %497 = arith.mulf %496, %495 : vector<1x256xf32>
      %498 = arith.addf %494, %497 : vector<1x256xf32>
      %c0_177 = arith.constant 0 : index
      %c146 = arith.constant 146 : index
      %499 = vector.load %arg7[%c0_177, %c146] : memref<1x435xf32, #tpu.memory_space<vmem>>, vector<1x256xf32>
      %500 = vector.broadcast %58 : f32 to vector<1x256xf32>
      %501 = arith.mulf %500, %499 : vector<1x256xf32>
      %502 = arith.addf %498, %501 : vector<1x256xf32>
      %c0_178 = arith.constant 0 : index
      %c146_179 = arith.constant 146 : index
      %503 = vector.load %arg8[%c0_178, %c146_179] : memref<1x435xf32, #tpu.memory_space<vmem>>, vector<1x256xf32>
      %504 = vector.broadcast %107 : f32 to vector<1x256xf32>
      %505 = arith.mulf %504, %503 : vector<1x256xf32>
      %506 = arith.addf %502, %505 : vector<1x256xf32>
      %c0_180 = arith.constant 0 : index
      %c162 = arith.constant 162 : index
      %507 = vector.load %arg7[%c0_180, %c162] : memref<1x435xf32, #tpu.memory_space<vmem>>, vector<1x256xf32>
      %508 = vector.broadcast %65 : f32 to vector<1x256xf32>
      %509 = arith.mulf %508, %507 : vector<1x256xf32>
      %510 = arith.addf %506, %509 : vector<1x256xf32>
      %c0_181 = arith.constant 0 : index
      %c162_182 = arith.constant 162 : index
      %511 = vector.load %arg8[%c0_181, %c162_182] : memref<1x435xf32, #tpu.memory_space<vmem>>, vector<1x256xf32>
      %512 = vector.broadcast %114 : f32 to vector<1x256xf32>
      %513 = arith.mulf %512, %511 : vector<1x256xf32>
      %514 = arith.addf %510, %513 : vector<1x256xf32>
      %c0_183 = arith.constant 0 : index
      %c178 = arith.constant 178 : index
      %515 = vector.load %arg7[%c0_183, %c178] : memref<1x435xf32, #tpu.memory_space<vmem>>, vector<1x256xf32>
      %516 = vector.broadcast %72 : f32 to vector<1x256xf32>
      %517 = arith.mulf %516, %515 : vector<1x256xf32>
      %518 = arith.addf %514, %517 : vector<1x256xf32>
      %c0_184 = arith.constant 0 : index
      %c178_185 = arith.constant 178 : index
      %519 = vector.load %arg8[%c0_184, %c178_185] : memref<1x435xf32, #tpu.memory_space<vmem>>, vector<1x256xf32>
      %520 = vector.broadcast %121 : f32 to vector<1x256xf32>
      %521 = arith.mulf %520, %519 : vector<1x256xf32>
      %522 = arith.addf %518, %521 : vector<1x256xf32>
      %c-2_i32 = arith.constant -2 : i32
      %523 = vector.broadcast %c-2_i32 : i32 to vector<1x256xi32>
      %524 = arith.cmpi sge, %139, %523 : vector<1x256xi32>
      %c14_i32 = arith.constant 14 : i32
      %525 = vector.broadcast %c14_i32 : i32 to vector<1x256xi32>
      %526 = arith.cmpi slt, %139, %525 : vector<1x256xi32>
      %527 = arith.andi %524, %526 : vector<1x256xi1>
      %cst_186 = arith.constant 0.000000e+00 : f32
      %528 = vector.broadcast %cst_186 : f32 to vector<1x256xf32>
      %529 = arith.select %527, %522, %528 : vector<1x256xi1>, vector<1x256xf32>
      %530 = arith.addf %465, %529 : vector<1x256xf32>
      %cst_187 = arith.constant 0.000000e+00 : f32
      %531 = vector.broadcast %cst_187 : f32 to vector<1x256xf32>
      %c0_188 = arith.constant 0 : index
      %c83_189 = arith.constant 83 : index
      %532 = vector.load %arg7[%c0_188, %c83_189] : memref<1x435xf32, #tpu.memory_space<vmem>>, vector<1x256xf32>
      %533 = vector.broadcast %31 : f32 to vector<1x256xf32>
      %534 = arith.mulf %533, %532 : vector<1x256xf32>
      %535 = arith.addf %531, %534 : vector<1x256xf32>
      %c0_190 = arith.constant 0 : index
      %c83_191 = arith.constant 83 : index
      %536 = vector.load %arg8[%c0_190, %c83_191] : memref<1x435xf32, #tpu.memory_space<vmem>>, vector<1x256xf32>
      %537 = vector.broadcast %80 : f32 to vector<1x256xf32>
      %538 = arith.mulf %537, %536 : vector<1x256xf32>
      %539 = arith.addf %535, %538 : vector<1x256xf32>
      %c0_192 = arith.constant 0 : index
      %c99 = arith.constant 99 : index
      %540 = vector.load %arg7[%c0_192, %c99] : memref<1x435xf32, #tpu.memory_space<vmem>>, vector<1x256xf32>
      %541 = vector.broadcast %38 : f32 to vector<1x256xf32>
      %542 = arith.mulf %541, %540 : vector<1x256xf32>
      %543 = arith.addf %539, %542 : vector<1x256xf32>
      %c0_193 = arith.constant 0 : index
      %c99_194 = arith.constant 99 : index
      %544 = vector.load %arg8[%c0_193, %c99_194] : memref<1x435xf32, #tpu.memory_space<vmem>>, vector<1x256xf32>
      %545 = vector.broadcast %87 : f32 to vector<1x256xf32>
      %546 = arith.mulf %545, %544 : vector<1x256xf32>
      %547 = arith.addf %543, %546 : vector<1x256xf32>
      %c0_195 = arith.constant 0 : index
      %c115 = arith.constant 115 : index
      %548 = vector.load %arg7[%c0_195, %c115] : memref<1x435xf32, #tpu.memory_space<vmem>>, vector<1x256xf32>
      %549 = vector.broadcast %45 : f32 to vector<1x256xf32>
      %550 = arith.mulf %549, %548 : vector<1x256xf32>
      %551 = arith.addf %547, %550 : vector<1x256xf32>
      %c0_196 = arith.constant 0 : index
      %c115_197 = arith.constant 115 : index
      %552 = vector.load %arg8[%c0_196, %c115_197] : memref<1x435xf32, #tpu.memory_space<vmem>>, vector<1x256xf32>
      %553 = vector.broadcast %94 : f32 to vector<1x256xf32>
      %554 = arith.mulf %553, %552 : vector<1x256xf32>
      %555 = arith.addf %551, %554 : vector<1x256xf32>
      %c0_198 = arith.constant 0 : index
      %c131 = arith.constant 131 : index
      %556 = vector.load %arg7[%c0_198, %c131] : memref<1x435xf32, #tpu.memory_space<vmem>>, vector<1x256xf32>
      %557 = vector.broadcast %52 : f32 to vector<1x256xf32>
      %558 = arith.mulf %557, %556 : vector<1x256xf32>
      %559 = arith.addf %555, %558 : vector<1x256xf32>
      %c0_199 = arith.constant 0 : index
      %c131_200 = arith.constant 131 : index
      %560 = vector.load %arg8[%c0_199, %c131_200] : memref<1x435xf32, #tpu.memory_space<vmem>>, vector<1x256xf32>
      %561 = vector.broadcast %101 : f32 to vector<1x256xf32>
      %562 = arith.mulf %561, %560 : vector<1x256xf32>
      %563 = arith.addf %559, %562 : vector<1x256xf32>
      %c0_201 = arith.constant 0 : index
      %c147 = arith.constant 147 : index
      %564 = vector.load %arg7[%c0_201, %c147] : memref<1x435xf32, #tpu.memory_space<vmem>>, vector<1x256xf32>
      %565 = vector.broadcast %59 : f32 to vector<1x256xf32>
      %566 = arith.mulf %565, %564 : vector<1x256xf32>
      %567 = arith.addf %563, %566 : vector<1x256xf32>
      %c0_202 = arith.constant 0 : index
      %c147_203 = arith.constant 147 : index
      %568 = vector.load %arg8[%c0_202, %c147_203] : memref<1x435xf32, #tpu.memory_space<vmem>>, vector<1x256xf32>
      %569 = vector.broadcast %108 : f32 to vector<1x256xf32>
      %570 = arith.mulf %569, %568 : vector<1x256xf32>
      %571 = arith.addf %567, %570 : vector<1x256xf32>
      %c0_204 = arith.constant 0 : index
      %c163 = arith.constant 163 : index
      %572 = vector.load %arg7[%c0_204, %c163] : memref<1x435xf32, #tpu.memory_space<vmem>>, vector<1x256xf32>
      %573 = vector.broadcast %66 : f32 to vector<1x256xf32>
      %574 = arith.mulf %573, %572 : vector<1x256xf32>
      %575 = arith.addf %571, %574 : vector<1x256xf32>
      %c0_205 = arith.constant 0 : index
      %c163_206 = arith.constant 163 : index
      %576 = vector.load %arg8[%c0_205, %c163_206] : memref<1x435xf32, #tpu.memory_space<vmem>>, vector<1x256xf32>
      %577 = vector.broadcast %115 : f32 to vector<1x256xf32>
      %578 = arith.mulf %577, %576 : vector<1x256xf32>
      %579 = arith.addf %575, %578 : vector<1x256xf32>
      %c0_207 = arith.constant 0 : index
      %c179 = arith.constant 179 : index
      %580 = vector.load %arg7[%c0_207, %c179] : memref<1x435xf32, #tpu.memory_space<vmem>>, vector<1x256xf32>
      %581 = vector.broadcast %73 : f32 to vector<1x256xf32>
      %582 = arith.mulf %581, %580 : vector<1x256xf32>
      %583 = arith.addf %579, %582 : vector<1x256xf32>
      %c0_208 = arith.constant 0 : index
      %c179_209 = arith.constant 179 : index
      %584 = vector.load %arg8[%c0_208, %c179_209] : memref<1x435xf32, #tpu.memory_space<vmem>>, vector<1x256xf32>
      %585 = vector.broadcast %122 : f32 to vector<1x256xf32>
      %586 = arith.mulf %585, %584 : vector<1x256xf32>
      %587 = arith.addf %583, %586 : vector<1x256xf32>
      %c-3_i32 = arith.constant -3 : i32
      %588 = vector.broadcast %c-3_i32 : i32 to vector<1x256xi32>
      %589 = arith.cmpi sge, %139, %588 : vector<1x256xi32>
      %c13_i32 = arith.constant 13 : i32
      %590 = vector.broadcast %c13_i32 : i32 to vector<1x256xi32>
      %591 = arith.cmpi slt, %139, %590 : vector<1x256xi32>
      %592 = arith.andi %589, %591 : vector<1x256xi1>
      %cst_210 = arith.constant 0.000000e+00 : f32
      %593 = vector.broadcast %cst_210 : f32 to vector<1x256xf32>
      %594 = arith.select %592, %587, %593 : vector<1x256xi1>, vector<1x256xf32>
      %595 = arith.addf %530, %594 : vector<1x256xf32>
      %cst_211 = arith.constant 0.000000e+00 : f32
      %596 = vector.broadcast %cst_211 : f32 to vector<1x256xf32>
      %597 = arith.subf %596, %595 : vector<1x256xf32>
      %598 = math.exp %597 : vector<1x256xf32>
      %cst_212 = arith.constant 1.000000e+00 : f32
      %599 = vector.broadcast %cst_212 : f32 to vector<1x256xf32>
      %600 = arith.addf %599, %598 : vector<1x256xf32>
      %cst_213 = arith.constant 1.000000e+00 : f32
      %601 = vector.broadcast %cst_213 : f32 to vector<1x256xf32>
      %602 = arith.divf %601, %600 : vector<1x256xf32>
      %c0_214 = arith.constant 0 : index
      %c0_215 = arith.constant 0 : index
      %c0_216 = arith.constant 0 : index
      %603 = vector.load %arg4[%c0_214, %c0_215, %c0_216] : memref<1x1x256xf32, #tpu.memory_space<vmem>>, vector<1x1x256xf32>
      %604 = vector.shape_cast %603 : vector<1x1x256xf32> to vector<1x256xf32>
      %605 = vector.shape_cast %602 : vector<1x256xf32> to vector<1x1x256xf32>
      tpu.vector_store %arg4[%c0_214, %c0_215, %c0_216], %605 {strides = array<i32>} : memref<1x1x256xf32, #tpu.memory_space<vmem>>, vector<1x1x256xf32>,
    } else {
    }
    return
  }
  func.func @transform_0(%arg0: i32, %arg1: i32) -> (i32, i32, i32) {
    %c0_i32 = arith.constant 0 : i32
    %c0_i32_0 = arith.constant 0 : i32
    return %arg0, %arg1, %c0_i32 : i32, i32, i32
  }
  func.func @transform_1(%arg0: i32, %arg1: i32) -> i32 {
    %c0_i32 = arith.constant 0 : i32
    %c0_i32_0 = arith.constant 0 : i32
    return %c0_i32 : i32
  }
  func.func @transform_2(%arg0: i32, %arg1: i32) -> (i32, i32, i32) {
    %c0_i32 = arith.constant 0 : i32
    %c0_i32_0 = arith.constant 0 : i32
    %c0_i32_1 = arith.constant 0 : i32
    return %arg0, %c0_i32, %c0_i32_0 : i32, i32, i32
  }
}

</mosaic_0001>

<llo_original>
// kernel: tpu_custom_call.1
$region0: #{tpu_custom_call.1}
  #allocation0 [shape = 'u32[]', space=smem, size = 0x4, offset = 0x4, fixed_abs, tag = 'smem constant byte address 0x4 - core index']
  #allocation1 [shape = 'u32[144,128]{1,0:T(1,128)}', space=vmem, size = 0x12000, scoped, tag = 'internal scratch']
  #allocation2 [shape = 'f32[1,256]{1,0:T(1,128)}', space=vmem, size = 0x400, scoped, tag = 'scratch operand']
  #allocation3 [shape = 'f32[1,256]{1,0:T(1,128)}', space=vmem, size = 0x400, scoped, tag = 'scratch operand']
  #allocation4 [shape = 'f32[1,435]{1,0:T(1,128)}', space=vmem, size = 0x800, scoped, tag = 'scratch operand']
  #allocation5 [shape = 'f32[1,435]{1,0:T(1,128)}', space=vmem, size = 0x800, scoped, tag = 'scratch operand']
  %s0 = inlined_call_operand.hbm [shape: f32[2,4,256], index: 0, kind: input, shape index: {}]
  %s1 = inlined_call_operand.vmem [shape: f32[98], index: 1, kind: input, shape index: {}]
  %s2 = inlined_call_operand.hbm [shape: f32[2,1,256], index: 2, kind: output, shape index: {}]
  %s3 = sld [smem:[#allocation0]]
  $region57: #{tpu_custom_call.1} parent=0
    _
  %s5 = ssub.s32 1, %s3
  %s6 = scalar_select 0, %s5, %s3
  $region1: #{tpu_custom_call.1} parent=0
    #allocation6 [shape = 'u8[8192]{0}', space=vmem, size = 0x2000, scoped, tag = 'input window, operand 0']
    #allocation7 [shape = 's32[2]{0}', space=sflag, size = 0x8, scoped, tag = 'scoped memory for tpu_custom_call.1']
    #allocation8 [shape = 's32[2]{0}', space=sflag, size = 0x8, scoped, tag = 'scoped memory for tpu_custom_call.1']
    #allocation9 [shape = 's32[2]{0}', space=sflag, size = 0x8, scoped, tag = 'scoped memory for tpu_custom_call.1']
    #allocation10 [shape = 'u8[512]{0}', space=smem, size = 0x200, scoped, tag = 'input window, operand 1, single buffered']
    #allocation11 [shape = 'u8[2048]{0}', space=vmem, size = 0x800, scoped, tag = 'output window, operand 0']
    %7 = vsyncpa [#allocation7], 0
    %s8 = scalar_lea.sflag [#allocation7], 1
    %9 = vsyncpa %s8, 0
    %10 = vsyncpa [#allocation9], 0
    %11 = vsyncpa [#allocation8], 0
    %s12 = scalar_lea.sflag [#allocation8], 1
    %13 = vsyncpa %s12, 0
    loop: start=0, step=1, limit=4
    $region2: #{tpu_custom_call.1} parent=1 // loop_pre_header
      _
    $region3: #{tpu_custom_call.1} parent=1 // loop_header
      %s15 = sphi 0, %s19
      %p16 = scmp.ge.s32.totalorder %s15, 4
      %s22 = sphi 0, %s34
      %s23 = sphi 0, %s30
      %s24 = sphi 0, %s22
      %s25 = sphi 0, %s23
      %s26 = sphi 0, %s24
      %s27 = sphi 0, %s25
      %s39 = sphi 0, %s41
      %s42 = sphi 0, %s39
      %s43 = sphi 0, %s42
      %s59 = sphi 0, %s43
      %s63 = sphi 0, %s63
      %s65 = sphi 0, %s63
      %s66 = sphi 0, %s65
      %s80 = sphi 0, %s66
      %s86 = sphi 0, %s88
      %s89 = sphi 0, %s86
      %s90 = sphi 0, %s89
      %s106 = sphi 0, %s90
    $region4: #{tpu_custom_call.1} parent=1 // loop_header_branch
      %18 = sbr.rel (%p16) target = $region8
    $region5: #{tpu_custom_call.1} parent=1 // loop_body
      %s20 = ssub.s32 %s15, 1
      %s21 = ssub.s32 %s15, 2
      %s28 = sadd.s32 1, %s23
      %p29 = scmp.ge.s32.totalorder %s28, 1
      %s30 = scalar_select %p29, 0, %s28
      %s31 = sadd.s32 1, %s22
      %s32 = scalar_select %p29, %s31, %s22
      %p33 = scmp.ge.s32.totalorder %s32, 2
      %s34 = scalar_select %p33, 0, %s32
      %s35 = ssub.s32 %s22, %s34
      %s36 = ssub.s32 %s23, %s30
      %s37 = sor.u32 %s35, %s36
      %p38 = scmp.eq.s32.totalorder %s37, 0
      %s40 = sadd.s32 %s39, 1
      %s41 = scalar_select %p38, %s39, %s40
      %p44 = pneg %p38
      %p45 = scmp.eq.s32.totalorder %s15, 1
      %p46 = por %p44, %p45
      %p47 = scmp.ne.s32.totalorder %s39, %s42
      %p48 = scmp.eq.s32.totalorder %s15, 0
      %p49 = por %p47, %p48
      %p50 = scmp.ne.s32.totalorder %s39, %s42
      %p51 = scmp.eq.s32.totalorder %s20, 1
      %p52 = por %p50, %p51
      %p53 = scmp.ne.s32.totalorder %s42, %s43
      %p54 = scmp.eq.s32.totalorder %s20, 0
      %p55 = por %p53, %p54
      %p56 = scmp.ne.s32.totalorder %s42, %s43
      %p57 = scmp.eq.s32.totalorder %s21, 1
      %p58 = por %p56, %p57
      %p60 = scmp.ne.s32.totalorder %s43, %s59
      %p61 = scmp.eq.s32.totalorder %s21, 0
      %p62 = por %p60, %p61
      %s64 = sadd.s32 %s63, 1
      %p67 = scmp.eq.s32.totalorder %s15, 1
      %p68 = scmp.ne.s32.totalorder %s63, %s65
      %p69 = scmp.eq.s32.totalorder %s15, 0
      %p70 = por %p68, %p69
      %p71 = scmp.ne.s32.totalorder %s63, %s65
      %p72 = scmp.eq.s32.totalorder %s20, 1
      %p73 = por %p71, %p72
      %p74 = scmp.ne.s32.totalorder %s65, %s66
      %p75 = scmp.eq.s32.totalorder %s20, 0
      %p76 = por %p74, %p75
      %p77 = scmp.ne.s32.totalorder %s65, %s66
      %p78 = scmp.eq.s32.totalorder %s21, 1
      %p79 = por %p77, %p78
      %p81 = scmp.ne.s32.totalorder %s66, %s80
      %p82 = scmp.eq.s32.totalorder %s21, 0
      %p83 = por %p81, %p82
      %s84 = ssub.s32 %s22, %s34
      %p85 = scmp.eq.s32.totalorder %s84, 0
      %s87 = sadd.s32 %s86, 1
      %s88 = scalar_select %p85, %s86, %s87
      %p91 = pneg %p85
      %p92 = scmp.eq.s32.totalorder %s15, 1
      %p93 = por %p91, %p92
      %p94 = scmp.ne.s32.totalorder %s86, %s89
      %p95 = scmp.eq.s32.totalorder %s15, 0
      %p96 = por %p94, %p95
      %p97 = scmp.ne.s32.totalorder %s86, %s89
      %p98 = scmp.eq.s32.totalorder %s20, 1
      %p99 = por %p97, %p98
      %p100 = scmp.ne.s32.totalorder %s89, %s90
      %p101 = scmp.eq.s32.totalorder %s20, 0
      %p102 = por %p100, %p101
      %p103 = scmp.ne.s32.totalorder %s89, %s90
      %p104 = scmp.eq.s32.totalorder %s21, 1
      %p105 = por %p103, %p104
      %p107 = scmp.ne.s32.totalorder %s90, %s106
      %p108 = scmp.eq.s32.totalorder %s21, 0
      %p109 = por %p107, %p108
      %p110 = scmp.le.s32.totalorder 1, %s15
      %p111 = scmp.lt.s32.totalorder %s15, 3
      %p112 = pnand %p110, %p111
      %p113 = pneg %p112
      // Predicated region
      $region9: #{tpu_custom_call.1} parent=5 // pred_check
        _
      $region10: #{tpu_custom_call.1} parent=5 // pred_check_branch
        %115 = sbr.rel (%p112) target = $region12
      $region11: #{tpu_custom_call.1} parent=5 // pred_region
        %s116 = ssub.s32 %s15, 1
        // Predicated region
        $region13: #{tpu_custom_call.1} parent=11 // pred_check
          %p117 = pneg %p76
        $region14: #{tpu_custom_call.1} parent=11 // pred_check_branch
          %119 = sbr.rel (%p117) target = $region16
        $region15: #{tpu_custom_call.1} parent=11 // pred_region
          %s121 = ssub.s32 16, 16
          %122 = vsyncadd [#allocation9], %s121
          %s124 = sshll.u32 %s1, 4
          %s125 = int_to_ptr.vmem [resolvable:$true] %s124
          %127 = dma.vmem_to_smem %s125, 16, [#allocation10], [#allocation9]
        $region16: #{tpu_custom_call.1} parent=11 // pred_fallthru
          _
      $region12: #{tpu_custom_call.1} parent=5 // pred_fallthru
        _
      %p128 = scmp.lt.s32.totalorder %s15, 2
      // Predicated region
      $region17: #{tpu_custom_call.1} parent=5 // pred_check
        %p129 = pneg %p128
      $region18: #{tpu_custom_call.1} parent=5 // pred_check_branch
        %131 = sbr.rel (%p129) target = $region20
      $region19: #{tpu_custom_call.1} parent=5 // pred_region
        // Predicated region
        $region21: #{tpu_custom_call.1} parent=19 // pred_check
          %p132 = pneg %p49
        $region22: #{tpu_custom_call.1} parent=19 // pred_check_branch
          %134 = sbr.rel (%p132) target = $region24
        $region23: #{tpu_custom_call.1} parent=19 // pred_region
          %s135 = sand.u32 %s39, 1
          %s136 = scalar_lea.sflag [#allocation7], %s135
          %s137 = sand.u32 %s39, 1
          %s138 = smul.addr %s137, 8
          %s139 = scalar_lea.vmem [#allocation6], %s138
          %s141 = ssub.s32 128, 128
          %142 = vsyncadd %s136, %s141
          %s143 = smul.addr %s23, 2
          %s144 = smul.addr %s22, 2
          %s145 = sadd.s32 %s143, %s144
          %s146 = smul.addr %s145, 64
          %s147 = scalar_lea.hbm %s0, %s146
          %s149 = sshll.u32 %s139, 4
          %s150 = int_to_ptr.vmem [resolvable:$true] %s149
          %152 = dma.hbm_to_vmem [thread:$0]  %s147, 128, %s150, %s136
        $region24: #{tpu_custom_call.1} parent=19 // pred_fallthru
          _
      $region20: #{tpu_custom_call.1} parent=5 // pred_fallthru
        _
      %p153 = scmp.le.s32.totalorder 1, %s15
      %p154 = scmp.lt.s32.totalorder %s15, 3
      %p155 = pnand %p153, %p154
      %p156 = pneg %p155
      // Predicated region
      $region25: #{tpu_custom_call.1} parent=5 // pred_check
        _
      $region26: #{tpu_custom_call.1} parent=5 // pred_check_branch
        %158 = sbr.rel (%p155) target = $region28
      $region27: #{tpu_custom_call.1} parent=5 // pred_region
        %s159 = ssub.s32 %s15, 1
        %s160 = sand.u32 %s42, 1
        %s161 = scalar_lea.sflag [#allocation7], %s160
        %s162 = sand.u32 %s42, 1
        %s163 = smul.addr %s162, 8
        %s164 = scalar_lea.vmem [#allocation6], %s163
        // Predicated region
        $region29: #{tpu_custom_call.1} parent=27 // pred_check
          %p165 = pneg %p55
        $region30: #{tpu_custom_call.1} parent=27 // pred_check_branch
          %167 = sbr.rel (%p165) target = $region32
        $region31: #{tpu_custom_call.1} parent=27 // pred_region
          %168 = dma.done %s161, 128
        $region32: #{tpu_custom_call.1} parent=27 // pred_fallthru
          _
        // Predicated region
        $region33: #{tpu_custom_call.1} parent=27 // pred_check
          %p169 = pneg %p76
        $region34: #{tpu_custom_call.1} parent=27 // pred_check_branch
          %171 = sbr.rel (%p169) target = $region36
        $region35: #{tpu_custom_call.1} parent=27 // pred_region
          %172 = dma.done [#allocation9], 16
        $region36: #{tpu_custom_call.1} parent=27 // pred_fallthru
          _
        %173 = sfence
        %s174 = sand.u32 %s42, 1
        %s175 = scalar_lea.sflag [#allocation7], %s174
        %s176 = sand.u32 %s42, 1
        %s177 = smul.addr %s176, 8
        %s178 = scalar_lea.vmem [#allocation6], %s177
        %p179 = pneg %p55
        %p180 = pneg %p52
        %p181 = pneg %p76
        %p182 = pneg %p73
        %p183 = pneg %p102
        %p184 = pneg %p99
        %s185 = sand.u32 %s89, 1
        %s186 = scalar_lea.sflag [#allocation8], %s185
        %s187 = sand.u32 %s89, 1
        %s188 = smul.addr %s187, 2
        %s189 = scalar_lea.vmem [#allocation11], %s188
        %p190 = scmp.eq.s32.totalorder %s25, 0
        // Predicated region
        $region37: #{tpu_custom_call.1} parent=27 // pred_check
          %p191 = pneg %p190
        $region38: #{tpu_custom_call.1} parent=27 // pred_check_branch
          %193 = sbr.rel (%p191) target = $region40
        $region39: #{tpu_custom_call.1} parent=27 // pred_region
          %v194 = vlaneseq
          %vm195 = vcmp.ge.s32.totalorder %v194, 0
          %vm196 = vcmp.lt.s32.totalorder %v194, 256
          %vm197 = vmand %vm195, %vm196
          %198 = vst.msk [vmem:[#allocation2] sm:$0x3] %vm197, 0.0
          %199 = vst.msk [vmem:[#allocation3] sm:$0x3] %vm197, -inf
        $region40: #{tpu_custom_call.1} parent=27 // pred_fallthru
          _
        %v200 = vld [vmem:[%s164] sm:$0xff]
        %v201 = vld [vmem:[#allocation2] sm:$0x3]
        %v203 = vcombine.high %v200, %v200
        %vm205 = vcmask 1043456
        %v206 = vsel %vm205, %v200, 0.0
        %v207 = vrot.slane %v206, 4
        %v208 = vadd.f32 %v206, %v207
        %v209 = vrot.slane %v208, 2
        %v210 = vadd.f32 %v208, %v209
        %v211 = vrot.slane %v210, 1
        %v212 = vadd.f32 %v210, %v211
        %v213 = vsel %vm205, %v203, 0.0
        %v214 = vrot.slane %v213, 4
        %v215 = vadd.f32 %v213, %v214
        %v216 = vrot.slane %v215, 2
        %v217 = vadd.f32 %v215, %v216
        %v218 = vrot.slane %v217, 1
        %v219 = vadd.f32 %v217, %v218
        %v222 = vcombine.low %v212, %v219
        %v224 = vunpack.c.l.s4 1966171168
        %v225 = vunpack.c.0.s8 %v224
        %v226 = vlaneseq
        %v227 = vshrl.u32 %v226, 7
        %v228 = vsub.s32 %v225, %v227
        %v229 = vrot.slane %v222, %v228
        %v231 = vunpack.c.l.s4 1966171168
        %v232 = vunpack.c.0.s8 %v231
        %v233 = vlaneseq
        %v234 = vshrl.u32 %v233, 7
        %v235 = vsub.s32 %v232, %v234
        %v236 = vrot.slane %v229, %v235
        %v238 = vadd.f32 %v201, %v236
        %v239 = vlaneseq
        %vm240 = vcmp.ge.s32.totalorder %v239, 0
        %vm241 = vcmp.lt.s32.totalorder %v239, 256
        %vm242 = vmand %vm240, %vm241
        %243 = vst.msk [vmem:[#allocation2] sm:$0x3] %vm242, %v238
        %v244 = vld [vmem:[#allocation3] sm:$0x3]
        %v245 = vsel %vm205, %v200, -inf
        %v246 = vrot.slane %v245, 4
        %v247 = vmax.f32 %v245, %v246
        %v248 = vrot.slane %v247, 2
        %v249 = vmax.f32 %v247, %v248
        %v250 = vrot.slane %v249, 1
        %v251 = vmax.f32 %v249, %v250
        %v252 = vsel %vm205, %v203, -inf
        %v253 = vrot.slane %v252, 4
        %v254 = vmax.f32 %v252, %v253
        %v255 = vrot.slane %v254, 2
        %v256 = vmax.f32 %v254, %v255
        %v257 = vrot.slane %v256, 1
        %v258 = vmax.f32 %v256, %v257
        %v261 = vcombine.low %v251, %v258
        %v263 = vunpack.c.l.s4 1966171168
        %v264 = vunpack.c.0.s8 %v263
        %v265 = vlaneseq
        %v266 = vshrl.u32 %v265, 7
        %v267 = vsub.s32 %v264, %v266
        %v268 = vrot.slane %v261, %v267
        %v270 = vunpack.c.l.s4 1966171168
        %v271 = vunpack.c.0.s8 %v270
        %v272 = vlaneseq
        %v273 = vshrl.u32 %v272, 7
        %v274 = vsub.s32 %v271, %v273
        %v275 = vrot.slane %v268, %v274
        %v277 = vmax.f32 %v244, %v275
        %278 = vst.msk [vmem:[#allocation3] sm:$0x3] %vm242, %v277
        // Predicated region
        $region41: #{tpu_custom_call.1} parent=27 // pred_check
          %p279 = pneg %p190
        $region42: #{tpu_custom_call.1} parent=27 // pred_check_branch
          %281 = sbr.rel (%p279) target = $region44
        $region43: #{tpu_custom_call.1} parent=27 // pred_region
          %v282 = vld [vmem:[#allocation2] sm:$0x3]
          %v283 = vmul.f32 %v282, 0.25
          %v284 = vld [vmem:[#allocation3] sm:$0x3]
          %vm285 = vcmp.lt.s32.totalorder %v239, 435
          %vm286 = vmand %vm240, %vm285
          %287 = vst.msk [vmem:[#allocation4] sm:$0xf] %vm286, 0.0
          %288 = vst.msk [vmem:[#allocation5] sm:$0xf] %vm286, 0.0
          %289 = vst.msk [vmem:[#allocation4 + $0x1] sm:$0x3] %vm242, %v283
          %290 = vst.msk [vmem:[#allocation5 + $0x1] sm:$0x3] %vm242, %v284
          %s291 = sld [smem:[#allocation10]]
          %s292 = sld [smem:[#allocation10 + $0x1]]
          %s293 = sld [smem:[#allocation10 + $0x2]]
          %s294 = sld [smem:[#allocation10 + $0x3]]
          %s295 = sld [smem:[#allocation10 + $0x4]]
          %s296 = sld [smem:[#allocation10 + $0x5]]
          %s297 = sld [smem:[#allocation10 + $0x6]]
          %s298 = sld [smem:[#allocation10 + $0x7]]
          %s299 = sld [smem:[#allocation10 + $0x8]]
          %s300 = sld [smem:[#allocation10 + $0x9]]
          %s301 = sld [smem:[#allocation10 + $0xa]]
          %s302 = sld [smem:[#allocation10 + $0xb]]
          %s303 = sld [smem:[#allocation10 + $0xc]]
          %s304 = sld [smem:[#allocation10 + $0xd]]
          %s305 = sld [smem:[#allocation10 + $0xe]]
          %s306 = sld [smem:[#allocation10 + $0xf]]
          %s307 = sld [smem:[#allocation10 + $0x10]]
          %s308 = sld [smem:[#allocation10 + $0x11]]
          %s309 = sld [smem:[#allocation10 + $0x12]]
          %s310 = sld [smem:[#allocation10 + $0x13]]
          %s311 = sld [smem:[#allocation10 + $0x14]]
          %s312 = sld [smem:[#allocation10 + $0x15]]
          %s313 = sld [smem:[#allocation10 + $0x16]]
          %s314 = sld [smem:[#allocation10 + $0x17]]
          %s315 = sld [smem:[#allocation10 + $0x18]]
          %s316 = sld [smem:[#allocation10 + $0x19]]
          %s317 = sld [smem:[#allocation10 + $0x1a]]
          %s318 = sld [smem:[#allocation10 + $0x1b]]
          %s319 = sld [smem:[#allocation10 + $0x1c]]
          %s320 = sld [smem:[#allocation10 + $0x1d]]
          %s321 = sld [smem:[#allocation10 + $0x1e]]
          %s322 = sld [smem:[#allocation10 + $0x1f]]
          %s323 = sld [smem:[#allocation10 + $0x20]]
          %s324 = sld [smem:[#allocation10 + $0x21]]
          %s325 = sld [smem:[#allocation10 + $0x22]]
          %s326 = sld [smem:[#allocation10 + $0x23]]
          %s327 = sld [smem:[#allocation10 + $0x24]]
          %s328 = sld [smem:[#allocation10 + $0x25]]
          %s329 = sld [smem:[#allocation10 + $0x26]]
          %s330 = sld [smem:[#allocation10 + $0x27]]
          %s331 = sld [smem:[#allocation10 + $0x28]]
          %s332 = sld [smem:[#allocation10 + $0x29]]
          %s333 = sld [smem:[#allocation10 + $0x2a]]
          %s334 = sld [smem:[#allocation10 + $0x2b]]
          %s335 = sld [smem:[#allocation10 + $0x2c]]
          %s336 = sld [smem:[#allocation10 + $0x2d]]
          %s337 = sld [smem:[#allocation10 + $0x2e]]
          %s338 = sld [smem:[#allocation10 + $0x2f]]
          %s339 = sld [smem:[#allocation10 + $0x30]]
          %s340 = sld [smem:[#allocation10 + $0x31]]
          %s341 = sld [smem:[#allocation10 + $0x32]]
          %s342 = sld [smem:[#allocation10 + $0x33]]
          %s343 = sld [smem:[#allocation10 + $0x34]]
          %s344 = sld [smem:[#allocation10 + $0x35]]
          %s345 = sld [smem:[#allocation10 + $0x36]]
          %s346 = sld [smem:[#allocation10 + $0x37]]
          %s347 = sld [smem:[#allocation10 + $0x38]]
          %s348 = sld [smem:[#allocation10 + $0x39]]
          %s349 = sld [smem:[#allocation10 + $0x3a]]
          %s350 = sld [smem:[#allocation10 + $0x3b]]
          %s351 = sld [smem:[#allocation10 + $0x3c]]
          %s352 = sld [smem:[#allocation10 + $0x3d]]
          %s353 = sld [smem:[#allocation10 + $0x3e]]
          %s354 = sld [smem:[#allocation10 + $0x3f]]
          %s355 = sld [smem:[#allocation10 + $0x40]]
          %s356 = sld [smem:[#allocation10 + $0x41]]
          %s357 = sld [smem:[#allocation10 + $0x42]]
          %s358 = sld [smem:[#allocation10 + $0x43]]
          %s359 = sld [smem:[#allocation10 + $0x44]]
          %s360 = sld [smem:[#allocation10 + $0x45]]
          %s361 = sld [smem:[#allocation10 + $0x46]]
          %s362 = sld [smem:[#allocation10 + $0x47]]
          %s363 = sld [smem:[#allocation10 + $0x48]]
          %s364 = sld [smem:[#allocation10 + $0x49]]
          %s365 = sld [smem:[#allocation10 + $0x4a]]
          %s366 = sld [smem:[#allocation10 + $0x4b]]
          %s367 = sld [smem:[#allocation10 + $0x4c]]
          %s368 = sld [smem:[#allocation10 + $0x4d]]
          %s369 = sld [smem:[#allocation10 + $0x4e]]
          %s370 = sld [smem:[#allocation10 + $0x4f]]
          %s371 = sld [smem:[#allocation10 + $0x50]]
          %s372 = sld [smem:[#allocation10 + $0x51]]
          %s373 = sld [smem:[#allocation10 + $0x52]]
          %s374 = sld [smem:[#allocation10 + $0x53]]
          %s375 = sld [smem:[#allocation10 + $0x54]]
          %s376 = sld [smem:[#allocation10 + $0x55]]
          %s377 = sld [smem:[#allocation10 + $0x56]]
          %s378 = sld [smem:[#allocation10 + $0x57]]
          %s379 = sld [smem:[#allocation10 + $0x58]]
          %s380 = sld [smem:[#allocation10 + $0x59]]
          %s381 = sld [smem:[#allocation10 + $0x5a]]
          %s382 = sld [smem:[#allocation10 + $0x5b]]
          %s383 = sld [smem:[#allocation10 + $0x5c]]
          %s384 = sld [smem:[#allocation10 + $0x5d]]
          %s385 = sld [smem:[#allocation10 + $0x5e]]
          %s386 = sld [smem:[#allocation10 + $0x5f]]
          %s387 = sld [smem:[#allocation10 + $0x60]]
          %s388 = sld [smem:[#allocation10 + $0x61]]
          %v389 = vlaneseq
          %v390 = vand.u32 %v389, 127
          %v391 = vadd.s32 %v390, 128
          %vm392 = vcmp.lt.s32.totalorder %v390, 0
          %v393 = vsub.s32 0, %v390
          %v394 = vsel %vm392, %v393, %v390
          %v395 = vshrl.u32 %v394, 4
          %v396 = vand.u32 %v394, 15
          %v397 = vsub.s32 0, %v396
          %v398 = vsel %vm392, %v397, %v396
          %vm399 = vcmp.lt.s32.totalorder %v391, 0
          %v400 = vsub.s32 0, %v391
          %v401 = vsel %vm399, %v400, %v391
          %v402 = vshrl.u32 %v401, 4
          %v403 = vand.u32 %v401, 15
          %v404 = vsub.s32 0, %v403
          %v405 = vsel %vm399, %v404, %v403
          %vm406 = vcmp.ne.s32.totalorder %v398, 0
          %vm407 = vcmp.ne.s32.totalorder %v405, 0
          %vm408 = vcmp.lt.s32.totalorder %v398, 0
          %vm409 = vcmp.lt.s32.totalorder %v405, 0
          %vm410 = vmand %vm408, %vm406
          %vm411 = vmand %vm409, %vm407
          %v412 = vadd.s32 %v398, 16
          %v413 = vadd.s32 %v405, 16
          %v414 = vsel %vm410, %v412, %v398
          %v415 = vsel %vm411, %v413, %v405
          %v416 = vld [vmem:[#allocation4] sm:$0x7]
          %v417 = vstv %s291
          %v418 = vmul.f32 %v417, %v416
          %v419 = vadd.f32 %v418, 0.0
          %v420 = vld [vmem:[#allocation5] sm:$0x7]
          %v421 = vstv %s340
          %v422 = vmul.f32 %v421, %v420
          %v423 = vadd.f32 %v419, %v422
          %v424 = vstv %s298
          %v425 = vmul.f32 %v424, %v416
          %427 = vrot.lane.b32.xlu0 %v425, 112
          %v428 = vpop.permute.xlu0 %427
          %v429 = vrot.slane %v428, 1
          %vm430 = vcmask 916480
          %v431 = vsel %vm430, %v428, %v429
          %v433 = vadd.f32 %v423, %v431
          %v434 = vstv %s347
          %v435 = vmul.f32 %v434, %v420
          %437 = vrot.lane.b32.xlu0 %v435, 112
          %v438 = vpop.permute.xlu0 %437
          %v439 = vrot.slane %v438, 1
          %v440 = vsel %vm430, %v438, %v439
          %v442 = vadd.f32 %v433, %v440
          %v443 = vstv %s305
          %v444 = vmul.f32 %v443, %v416
          %446 = vrot.lane.b32.xlu0 %v444, 96
          %v447 = vpop.permute.xlu0 %446
          %v448 = vrot.slane %v447, 1
          %vm449 = vcmask 785408
          %v450 = vsel %vm449, %v447, %v448
          %v452 = vadd.f32 %v442, %v450
          %v453 = vstv %s354
          %v454 = vmul.f32 %v453, %v420
          %456 = vrot.lane.b32.xlu0 %v454, 96
          %v457 = vpop.permute.xlu0 %456
          %v458 = vrot.slane %v457, 1
          %v459 = vsel %vm449, %v457, %v458
          %v461 = vadd.f32 %v452, %v459
          %v462 = vstv %s312
          %v463 = vmul.f32 %v462, %v416
          %465 = vrot.lane.b32.xlu0 %v463, 80
          %v466 = vpop.permute.xlu0 %465
          %v467 = vrot.slane %v466, 1
          %vm468 = vcmask 654336
          %v469 = vsel %vm468, %v466, %v467
          %v471 = vadd.f32 %v461, %v469
          %v472 = vstv %s361
          %v473 = vmul.f32 %v472, %v420
          %475 = vrot.lane.b32.xlu0 %v473, 80
          %v476 = vpop.permute.xlu0 %475
          %v477 = vrot.slane %v476, 1
          %v478 = vsel %vm468, %v476, %v477
          %v480 = vadd.f32 %v471, %v478
          %v481 = vld [vmem:[#allocation4 + $0x1] sm:$0x7]
          %v482 = vstv %s319
          %v483 = vmul.f32 %v482, %v481
          %485 = vrot.lane.b32.xlu0 %v483, 64
          %v486 = vpop.permute.xlu0 %485
          %v487 = vrot.slane %v486, 7
          %vm488 = vcmask 523264
          %v489 = vsel %vm488, %v487, %v486
          %v491 = vadd.f32 %v480, %v489
          %v492 = vld [vmem:[#allocation5 + $0x1] sm:$0x7]
          %v493 = vstv %s368
          %v494 = vmul.f32 %v493, %v492
          %496 = vrot.lane.b32.xlu0 %v494, 64
          %v497 = vpop.permute.xlu0 %496
          %v498 = vrot.slane %v497, 7
          %v499 = vsel %vm488, %v498, %v497
          %v501 = vadd.f32 %v491, %v499
          %v502 = vstv %s326
          %v503 = vmul.f32 %v502, %v481
          %505 = vrot.lane.b32.xlu0 %v503, 48
          %v506 = vpop.permute.xlu0 %505
          %v507 = vrot.slane %v506, 7
          %vm508 = vcmask 392192
          %v509 = vsel %vm508, %v507, %v506
          %v511 = vadd.f32 %v501, %v509
          %v512 = vstv %s375
          %v513 = vmul.f32 %v512, %v492
          %515 = vrot.lane.b32.xlu0 %v513, 48
          %v516 = vpop.permute.xlu0 %515
          %v517 = vrot.slane %v516, 7
          %v518 = vsel %vm508, %v517, %v516
          %v520 = vadd.f32 %v511, %v518
          %v521 = vstv %s333
          %v522 = vmul.f32 %v521, %v481
          %524 = vrot.lane.b32.xlu0 %v522, 32
          %v525 = vpop.permute.xlu0 %524
          %v526 = vrot.slane %v525, 7
          %vm527 = vcmask 261120
          %v528 = vsel %vm527, %v526, %v525
          %v530 = vadd.f32 %v520, %v528
          %v531 = vstv %s382
          %v532 = vmul.f32 %v531, %v492
          %534 = vrot.lane.b32.xlu0 %v532, 32
          %v535 = vpop.permute.xlu0 %534
          %v536 = vrot.slane %v535, 7
          %v537 = vsel %vm527, %v536, %v535
          %v539 = vadd.f32 %v530, %v537
          %vm540 = vcmp.ge.s32.totalorder %v414, 3
          %vm541 = vcmp.ge.s32.totalorder %v415, 3
          %vm542 = vcmp.lt.s32.totalorder %v414, 19
          %vm543 = vcmp.lt.s32.totalorder %v415, 19
          %vm544 = vmand %vm540, %vm542
          %vm545 = vmand %vm541, %vm543
          %v547 = vlaneseq
          %v548 = vshrl.u32 %v547, 7
          %v549 = vsub.s32 0, %v548
          %v550 = vrot.slane %v539, %v549
          %v551 = vlaneseq
          %v552 = vshrl.u32 %v551, 7
          %v553 = vsub.s32 1, %v552
          %v554 = vrot.slane %v539, %v553
          %v555 = vlaneseq
          %v556 = vshrl.u32 %v555, 7
          %v557 = vsub.s32 2, %v556
          %v558 = vrot.slane %v539, %v557
          %559 = vrot.lane.b32.xlu0 %v550, 51
          %v560 = vpop.permute.xlu0 %559
          %561 = vrot.lane.b32.xlu0 %v554, 51
          %v562 = vpop.permute.xlu0 %561
          %563 = vrot.lane.b32.xlu0 %v558, 51
          %v564 = vpop.permute.xlu0 %563
          %vm565 = vcmask 416768
          %v566 = vsel %vm565, %v560, %v562
          %v567 = vsel %vm565, %v562, %v564
          %v570 = vsel %vm544, %v566, 0.0
          %v571 = vsel %vm545, %v567, 0.0
          %v572 = vadd.f32 %v570, 0.0
          %v573 = vadd.f32 %v571, 0.0
          %v574 = vstv %s292
          %v575 = vmul.f32 %v574, %v416
          %v576 = vadd.f32 %v575, 0.0
          %v577 = vstv %s341
          %v578 = vmul.f32 %v577, %v420
          %v579 = vadd.f32 %v576, %v578
          %v580 = vstv %s299
          %v581 = vmul.f32 %v580, %v416
          %583 = vrot.lane.b32.xlu0 %v581, 112
          %v584 = vpop.permute.xlu0 %583
          %v585 = vrot.slane %v584, 1
          %v586 = vsel %vm430, %v584, %v585
          %v588 = vadd.f32 %v579, %v586
          %v589 = vstv %s348
          %v590 = vmul.f32 %v589, %v420
          %592 = vrot.lane.b32.xlu0 %v590, 112
          %v593 = vpop.permute.xlu0 %592
          %v594 = vrot.slane %v593, 1
          %v595 = vsel %vm430, %v593, %v594
          %v597 = vadd.f32 %v588, %v595
          %v598 = vstv %s306
          %v599 = vmul.f32 %v598, %v416
          %601 = vrot.lane.b32.xlu0 %v599, 96
          %v602 = vpop.permute.xlu0 %601
          %v603 = vrot.slane %v602, 1
          %v604 = vsel %vm449, %v602, %v603
          %v606 = vadd.f32 %v597, %v604
          %v607 = vstv %s355
          %v608 = vmul.f32 %v607, %v420
          %610 = vrot.lane.b32.xlu0 %v608, 96
          %v611 = vpop.permute.xlu0 %610
          %v612 = vrot.slane %v611, 1
          %v613 = vsel %vm449, %v611, %v612
          %v615 = vadd.f32 %v606, %v613
          %v616 = vstv %s313
          %v617 = vmul.f32 %v616, %v416
          %619 = vrot.lane.b32.xlu0 %v617, 80
          %v620 = vpop.permute.xlu0 %619
          %v621 = vrot.slane %v620, 1
          %v622 = vsel %vm468, %v620, %v621
          %v624 = vadd.f32 %v615, %v622
          %v625 = vstv %s362
          %v626 = vmul.f32 %v625, %v420
          %628 = vrot.lane.b32.xlu0 %v626, 80
          %v629 = vpop.permute.xlu0 %628
          %v630 = vrot.slane %v629, 1
          %v631 = vsel %vm468, %v629, %v630
          %v633 = vadd.f32 %v624, %v631
          %v634 = vstv %s320
          %v635 = vmul.f32 %v634, %v481
          %637 = vrot.lane.b32.xlu0 %v635, 64
          %v638 = vpop.permute.xlu0 %637
          %v639 = vrot.slane %v638, 7
          %v640 = vsel %vm488, %v639, %v638
          %v642 = vadd.f32 %v633, %v640
          %v643 = vstv %s369
          %v644 = vmul.f32 %v643, %v492
          %646 = vrot.lane.b32.xlu0 %v644, 64
          %v647 = vpop.permute.xlu0 %646
          %v648 = vrot.slane %v647, 7
          %v649 = vsel %vm488, %v648, %v647
          %v651 = vadd.f32 %v642, %v649
          %v652 = vstv %s327
          %v653 = vmul.f32 %v652, %v481
          %655 = vrot.lane.b32.xlu0 %v653, 48
          %v656 = vpop.permute.xlu0 %655
          %v657 = vrot.slane %v656, 7
          %v658 = vsel %vm508, %v657, %v656
          %v660 = vadd.f32 %v651, %v658
          %v661 = vstv %s376
          %v662 = vmul.f32 %v661, %v492
          %664 = vrot.lane.b32.xlu0 %v662, 48
          %v665 = vpop.permute.xlu0 %664
          %v666 = vrot.slane %v665, 7
          %v667 = vsel %vm508, %v666, %v665
          %v669 = vadd.f32 %v660, %v667
          %v670 = vstv %s334
          %v671 = vmul.f32 %v670, %v481
          %673 = vrot.lane.b32.xlu0 %v671, 32
          %v674 = vpop.permute.xlu0 %673
          %v675 = vrot.slane %v674, 7
          %v676 = vsel %vm527, %v675, %v674
          %v678 = vadd.f32 %v669, %v676
          %v679 = vstv %s383
          %v680 = vmul.f32 %v679, %v492
          %682 = vrot.lane.b32.xlu0 %v680, 32
          %v683 = vpop.permute.xlu0 %682
          %v684 = vrot.slane %v683, 7
          %v685 = vsel %vm527, %v684, %v683
          %v687 = vadd.f32 %v678, %v685
          %vm688 = vcmp.ge.s32.totalorder %v414, 2
          %vm689 = vcmp.ge.s32.totalorder %v415, 2
          %vm690 = vcmp.lt.s32.totalorder %v414, 18
          %vm691 = vcmp.lt.s32.totalorder %v415, 18
          %vm692 = vmand %vm688, %vm690
          %vm693 = vmand %vm689, %vm691
          %v695 = vlaneseq
          %v696 = vshrl.u32 %v695, 7
          %v697 = vsub.s32 0, %v696
          %v698 = vrot.slane %v687, %v697
          %v699 = vlaneseq
          %v700 = vshrl.u32 %v699, 7
          %v701 = vsub.s32 1, %v700
          %v702 = vrot.slane %v687, %v701
          %v703 = vlaneseq
          %v704 = vshrl.u32 %v703, 7
          %v705 = vsub.s32 2, %v704
          %v706 = vrot.slane %v687, %v705
          %707 = vrot.lane.b32.xlu0 %v698, 50
          %v708 = vpop.permute.xlu0 %707
          %709 = vrot.lane.b32.xlu0 %v702, 50
          %v710 = vpop.permute.xlu0 %709
          %711 = vrot.lane.b32.xlu0 %v706, 50
          %v712 = vpop.permute.xlu0 %711
          %vm713 = vcmask 408576
          %v714 = vsel %vm713, %v708, %v710
          %v715 = vsel %vm713, %v710, %v712
          %v718 = vsel %vm692, %v714, 0.0
          %v719 = vsel %vm693, %v715, 0.0
          %v720 = vadd.f32 %v572, %v718
          %v721 = vadd.f32 %v573, %v719
          %v722 = vstv %s293
          %v723 = vmul.f32 %v722, %v416
          %v724 = vadd.f32 %v723, 0.0
          %v725 = vstv %s342
          %v726 = vmul.f32 %v725, %v420
          %v727 = vadd.f32 %v724, %v726
          %v728 = vstv %s300
          %v729 = vmul.f32 %v728, %v416
          %731 = vrot.lane.b32.xlu0 %v729, 112
          %v732 = vpop.permute.xlu0 %731
          %v733 = vrot.slane %v732, 1
          %v734 = vsel %vm430, %v732, %v733
          %v736 = vadd.f32 %v727, %v734
          %v737 = vstv %s349
          %v738 = vmul.f32 %v737, %v420
          %740 = vrot.lane.b32.xlu0 %v738, 112
          %v741 = vpop.permute.xlu0 %740
          %v742 = vrot.slane %v741, 1
          %v743 = vsel %vm430, %v741, %v742
          %v745 = vadd.f32 %v736, %v743
          %v746 = vstv %s307
          %v747 = vmul.f32 %v746, %v416
          %749 = vrot.lane.b32.xlu0 %v747, 96
          %v750 = vpop.permute.xlu0 %749
          %v751 = vrot.slane %v750, 1
          %v752 = vsel %vm449, %v750, %v751
          %v754 = vadd.f32 %v745, %v752
          %v755 = vstv %s356
          %v756 = vmul.f32 %v755, %v420
          %758 = vrot.lane.b32.xlu0 %v756, 96
          %v759 = vpop.permute.xlu0 %758
          %v760 = vrot.slane %v759, 1
          %v761 = vsel %vm449, %v759, %v760
          %v763 = vadd.f32 %v754, %v761
          %v764 = vstv %s314
          %v765 = vmul.f32 %v764, %v416
          %767 = vrot.lane.b32.xlu0 %v765, 80
          %v768 = vpop.permute.xlu0 %767
          %v769 = vrot.slane %v768, 1
          %v770 = vsel %vm468, %v768, %v769
          %v772 = vadd.f32 %v763, %v770
          %v773 = vstv %s363
          %v774 = vmul.f32 %v773, %v420
          %776 = vrot.lane.b32.xlu0 %v774, 80
          %v777 = vpop.permute.xlu0 %776
          %v778 = vrot.slane %v777, 1
          %v779 = vsel %vm468, %v777, %v778
          %v781 = vadd.f32 %v772, %v779
          %v782 = vstv %s321
          %v783 = vmul.f32 %v782, %v481
          %785 = vrot.lane.b32.xlu0 %v783, 64
          %v786 = vpop.permute.xlu0 %785
          %v787 = vrot.slane %v786, 7
          %v788 = vsel %vm488, %v787, %v786
          %v790 = vadd.f32 %v781, %v788
          %v791 = vstv %s370
          %v792 = vmul.f32 %v791, %v492
          %794 = vrot.lane.b32.xlu0 %v792, 64
          %v795 = vpop.permute.xlu0 %794
          %v796 = vrot.slane %v795, 7
          %v797 = vsel %vm488, %v796, %v795
          %v799 = vadd.f32 %v790, %v797
          %v800 = vstv %s328
          %v801 = vmul.f32 %v800, %v481
          %803 = vrot.lane.b32.xlu0 %v801, 48
          %v804 = vpop.permute.xlu0 %803
          %v805 = vrot.slane %v804, 7
          %v806 = vsel %vm508, %v805, %v804
          %v808 = vadd.f32 %v799, %v806
          %v809 = vstv %s377
          %v810 = vmul.f32 %v809, %v492
          %812 = vrot.lane.b32.xlu0 %v810, 48
          %v813 = vpop.permute.xlu0 %812
          %v814 = vrot.slane %v813, 7
          %v815 = vsel %vm508, %v814, %v813
          %v817 = vadd.f32 %v808, %v815
          %v818 = vstv %s335
          %v819 = vmul.f32 %v818, %v481
          %821 = vrot.lane.b32.xlu0 %v819, 32
          %v822 = vpop.permute.xlu0 %821
          %v823 = vrot.slane %v822, 7
          %v824 = vsel %vm527, %v823, %v822
          %v826 = vadd.f32 %v817, %v824
          %v827 = vstv %s384
          %v828 = vmul.f32 %v827, %v492
          %830 = vrot.lane.b32.xlu0 %v828, 32
          %v831 = vpop.permute.xlu0 %830
          %v832 = vrot.slane %v831, 7
          %v833 = vsel %vm527, %v832, %v831
          %v835 = vadd.f32 %v826, %v833
          %vm836 = vcmp.ge.s32.totalorder %v414, 1
          %vm837 = vcmp.ge.s32.totalorder %v415, 1
          %vm838 = vcmp.lt.s32.totalorder %v414, 17
          %vm839 = vcmp.lt.s32.totalorder %v415, 17
          %vm840 = vmand %vm836, %vm838
          %vm841 = vmand %vm837, %vm839
          %v843 = vlaneseq
          %v844 = vshrl.u32 %v843, 7
          %v845 = vsub.s32 0, %v844
          %v846 = vrot.slane %v835, %v845
          %v847 = vlaneseq
          %v848 = vshrl.u32 %v847, 7
          %v849 = vsub.s32 1, %v848
          %v850 = vrot.slane %v835, %v849
          %v851 = vlaneseq
          %v852 = vshrl.u32 %v851, 7
          %v853 = vsub.s32 2, %v852
          %v854 = vrot.slane %v835, %v853
          %855 = vrot.lane.b32.xlu0 %v846, 49
          %v856 = vpop.permute.xlu0 %855
          %857 = vrot.lane.b32.xlu0 %v850, 49
          %v858 = vpop.permute.xlu0 %857
          %859 = vrot.lane.b32.xlu0 %v854, 49
          %v860 = vpop.permute.xlu0 %859
          %vm861 = vcmask 400384
          %v862 = vsel %vm861, %v856, %v858
          %v863 = vsel %vm861, %v858, %v860
          %v866 = vsel %vm840, %v862, 0.0
          %v867 = vsel %vm841, %v863, 0.0
          %v868 = vadd.f32 %v720, %v866
          %v869 = vadd.f32 %v721, %v867
          %v870 = vstv %s294
          %v871 = vmul.f32 %v870, %v416
          %v872 = vadd.f32 %v871, 0.0
          %v873 = vstv %s343
          %v874 = vmul.f32 %v873, %v420
          %v875 = vadd.f32 %v872, %v874
          %v876 = vstv %s301
          %v877 = vmul.f32 %v876, %v416
          %879 = vrot.lane.b32.xlu0 %v877, 112
          %v880 = vpop.permute.xlu0 %879
          %v881 = vrot.slane %v880, 1
          %v882 = vsel %vm430, %v880, %v881
          %v884 = vadd.f32 %v875, %v882
          %v885 = vstv %s350
          %v886 = vmul.f32 %v885, %v420
          %888 = vrot.lane.b32.xlu0 %v886, 112
          %v889 = vpop.permute.xlu0 %888
          %v890 = vrot.slane %v889, 1
          %v891 = vsel %vm430, %v889, %v890
          %v893 = vadd.f32 %v884, %v891
          %v894 = vstv %s308
          %v895 = vmul.f32 %v894, %v416
          %897 = vrot.lane.b32.xlu0 %v895, 96
          %v898 = vpop.permute.xlu0 %897
          %v899 = vrot.slane %v898, 1
          %v900 = vsel %vm449, %v898, %v899
          %v902 = vadd.f32 %v893, %v900
          %v903 = vstv %s357
          %v904 = vmul.f32 %v903, %v420
          %906 = vrot.lane.b32.xlu0 %v904, 96
          %v907 = vpop.permute.xlu0 %906
          %v908 = vrot.slane %v907, 1
          %v909 = vsel %vm449, %v907, %v908
          %v911 = vadd.f32 %v902, %v909
          %v912 = vld [vmem:[#allocation4 + $0x1] sm:$0x3]
          %v913 = vstv %s315
          %v914 = vmul.f32 %v913, %v912
          %916 = vrot.lane.b32.xlu0 %v914, 80
          %v917 = vpop.permute.xlu0 %916
          %v918 = vrot.slane %v917, 7
          %v919 = vsel %vm468, %v918, %v917
          %v921 = vadd.f32 %v911, %v919
          %v922 = vld [vmem:[#allocation5 + $0x1] sm:$0x3]
          %v923 = vstv %s364
          %v924 = vmul.f32 %v923, %v922
          %926 = vrot.lane.b32.xlu0 %v924, 80
          %v927 = vpop.permute.xlu0 %926
          %v928 = vrot.slane %v927, 7
          %v929 = vsel %vm468, %v928, %v927
          %v931 = vadd.f32 %v921, %v929
          %v932 = vstv %s322
          %v933 = vmul.f32 %v932, %v481
          %935 = vrot.lane.b32.xlu0 %v933, 64
          %v936 = vpop.permute.xlu0 %935
          %v937 = vrot.slane %v936, 7
          %v938 = vsel %vm488, %v937, %v936
          %v940 = vadd.f32 %v931, %v938
          %v941 = vstv %s371
          %v942 = vmul.f32 %v941, %v492
          %944 = vrot.lane.b32.xlu0 %v942, 64
          %v945 = vpop.permute.xlu0 %944
          %v946 = vrot.slane %v945, 7
          %v947 = vsel %vm488, %v946, %v945
          %v949 = vadd.f32 %v940, %v947
          %v950 = vstv %s329
          %v951 = vmul.f32 %v950, %v481
          %953 = vrot.lane.b32.xlu0 %v951, 48
          %v954 = vpop.permute.xlu0 %953
          %v955 = vrot.slane %v954, 7
          %v956 = vsel %vm508, %v955, %v954
          %v958 = vadd.f32 %v949, %v956
          %v959 = vstv %s378
          %v960 = vmul.f32 %v959, %v492
          %962 = vrot.lane.b32.xlu0 %v960, 48
          %v963 = vpop.permute.xlu0 %962
          %v964 = vrot.slane %v963, 7
          %v965 = vsel %vm508, %v964, %v963
          %v967 = vadd.f32 %v958, %v965
          %v968 = vstv %s336
          %v969 = vmul.f32 %v968, %v481
          %971 = vrot.lane.b32.xlu0 %v969, 32
          %v972 = vpop.permute.xlu0 %971
          %v973 = vrot.slane %v972, 7
          %v974 = vsel %vm527, %v973, %v972
          %v976 = vadd.f32 %v967, %v974
          %v977 = vstv %s385
          %v978 = vmul.f32 %v977, %v492
          %980 = vrot.lane.b32.xlu0 %v978, 32
          %v981 = vpop.permute.xlu0 %980
          %v982 = vrot.slane %v981, 7
          %v983 = vsel %vm527, %v982, %v981
          %v985 = vadd.f32 %v976, %v983
          %vm986 = vcmp.ge.s32.totalorder %v414, 0
          %vm987 = vcmp.ge.s32.totalorder %v415, 0
          %vm988 = vcmp.lt.s32.totalorder %v414, 16
          %vm989 = vcmp.lt.s32.totalorder %v415, 16
          %vm990 = vmand %vm986, %vm988
          %vm991 = vmand %vm987, %vm989
          %v993 = vlaneseq
          %v994 = vshrl.u32 %v993, 7
          %v995 = vsub.s32 0, %v994
          %v996 = vrot.slane %v985, %v995
          %v997 = vlaneseq
          %v998 = vshrl.u32 %v997, 7
          %v999 = vsub.s32 1, %v998
          %v1000 = vrot.slane %v985, %v999
          %v1001 = vlaneseq
          %v1002 = vshrl.u32 %v1001, 7
          %v1003 = vsub.s32 2, %v1002
          %v1004 = vrot.slane %v985, %v1003
          %1005 = vrot.lane.b32.xlu0 %v996, 48
          %v1006 = vpop.permute.xlu0 %1005
          %1007 = vrot.lane.b32.xlu0 %v1000, 48
          %v1008 = vpop.permute.xlu0 %1007
          %1009 = vrot.lane.b32.xlu0 %v1004, 48
          %v1010 = vpop.permute.xlu0 %1009
          %v1011 = vsel %vm508, %v1006, %v1008
          %v1012 = vsel %vm508, %v1008, %v1010
          %v1015 = vsel %vm990, %v1011, 0.0
          %v1016 = vsel %vm991, %v1012, 0.0
          %v1017 = vadd.f32 %v868, %v1015
          %v1018 = vadd.f32 %v869, %v1016
          %v1019 = vstv %s295
          %v1020 = vmul.f32 %v1019, %v416
          %v1021 = vadd.f32 %v1020, 0.0
          %v1022 = vstv %s344
          %v1023 = vmul.f32 %v1022, %v420
          %v1024 = vadd.f32 %v1021, %v1023
          %v1025 = vstv %s302
          %v1026 = vmul.f32 %v1025, %v416
          %1028 = vrot.lane.b32.xlu0 %v1026, 112
          %v1029 = vpop.permute.xlu0 %1028
          %v1030 = vrot.slane %v1029, 1
          %v1031 = vsel %vm430, %v1029, %v1030
          %v1033 = vadd.f32 %v1024, %v1031
          %v1034 = vstv %s351
          %v1035 = vmul.f32 %v1034, %v420
          %1037 = vrot.lane.b32.xlu0 %v1035, 112
          %v1038 = vpop.permute.xlu0 %1037
          %v1039 = vrot.slane %v1038, 1
          %v1040 = vsel %vm430, %v1038, %v1039
          %v1042 = vadd.f32 %v1033, %v1040
          %v1043 = vstv %s309
          %v1044 = vmul.f32 %v1043, %v416
          %1046 = vrot.lane.b32.xlu0 %v1044, 96
          %v1047 = vpop.permute.xlu0 %1046
          %v1048 = vrot.slane %v1047, 1
          %v1049 = vsel %vm449, %v1047, %v1048
          %v1051 = vadd.f32 %v1042, %v1049
          %v1052 = vstv %s358
          %v1053 = vmul.f32 %v1052, %v420
          %1055 = vrot.lane.b32.xlu0 %v1053, 96
          %v1056 = vpop.permute.xlu0 %1055
          %v1057 = vrot.slane %v1056, 1
          %v1058 = vsel %vm449, %v1056, %v1057
          %v1060 = vadd.f32 %v1051, %v1058
          %v1061 = vstv %s316
          %v1062 = vmul.f32 %v1061, %v481
          %1064 = vrot.lane.b32.xlu0 %v1062, 80
          %v1065 = vpop.permute.xlu0 %1064
          %v1066 = vrot.slane %v1065, 7
          %v1067 = vsel %vm468, %v1066, %v1065
          %v1069 = vadd.f32 %v1060, %v1067
          %v1070 = vstv %s365
          %v1071 = vmul.f32 %v1070, %v492
          %1073 = vrot.lane.b32.xlu0 %v1071, 80
          %v1074 = vpop.permute.xlu0 %1073
          %v1075 = vrot.slane %v1074, 7
          %v1076 = vsel %vm468, %v1075, %v1074
          %v1078 = vadd.f32 %v1069, %v1076
          %v1079 = vstv %s323
          %v1080 = vmul.f32 %v1079, %v481
          %1082 = vrot.lane.b32.xlu0 %v1080, 64
          %v1083 = vpop.permute.xlu0 %1082
          %v1084 = vrot.slane %v1083, 7
          %v1085 = vsel %vm488, %v1084, %v1083
          %v1087 = vadd.f32 %v1078, %v1085
          %v1088 = vstv %s372
          %v1089 = vmul.f32 %v1088, %v492
          %1091 = vrot.lane.b32.xlu0 %v1089, 64
          %v1092 = vpop.permute.xlu0 %1091
          %v1093 = vrot.slane %v1092, 7
          %v1094 = vsel %vm488, %v1093, %v1092
          %v1096 = vadd.f32 %v1087, %v1094
          %v1097 = vstv %s330
          %v1098 = vmul.f32 %v1097, %v481
          %1100 = vrot.lane.b32.xlu0 %v1098, 48
          %v1101 = vpop.permute.xlu0 %1100
          %v1102 = vrot.slane %v1101, 7
          %v1103 = vsel %vm508, %v1102, %v1101
          %v1105 = vadd.f32 %v1096, %v1103
          %v1106 = vstv %s379
          %v1107 = vmul.f32 %v1106, %v492
          %1109 = vrot.lane.b32.xlu0 %v1107, 48
          %v1110 = vpop.permute.xlu0 %1109
          %v1111 = vrot.slane %v1110, 7
          %v1112 = vsel %vm508, %v1111, %v1110
          %v1114 = vadd.f32 %v1105, %v1112
          %v1115 = vstv %s337
          %v1116 = vmul.f32 %v1115, %v481
          %1118 = vrot.lane.b32.xlu0 %v1116, 32
          %v1119 = vpop.permute.xlu0 %1118
          %v1120 = vrot.slane %v1119, 7
          %v1121 = vsel %vm527, %v1120, %v1119
          %v1123 = vadd.f32 %v1114, %v1121
          %v1124 = vstv %s386
          %v1125 = vmul.f32 %v1124, %v492
          %1127 = vrot.lane.b32.xlu0 %v1125, 32
          %v1128 = vpop.permute.xlu0 %1127
          %v1129 = vrot.slane %v1128, 7
          %v1130 = vsel %vm527, %v1129, %v1128
          %v1132 = vadd.f32 %v1123, %v1130
          %vm1133 = vcmp.ge.s32.totalorder %v414, 4294967295
          %vm1134 = vcmp.ge.s32.totalorder %v415, 4294967295
          %vm1135 = vcmp.lt.s32.totalorder %v414, 15
          %vm1136 = vcmp.lt.s32.totalorder %v415, 15
          %vm1137 = vmand %vm1133, %vm1135
          %vm1138 = vmand %vm1134, %vm1136
          %v1140 = vlaneseq
          %v1141 = vshrl.u32 %v1140, 7
          %v1142 = vsub.s32 0, %v1141
          %v1143 = vrot.slane %v1132, %v1142
          %v1144 = vlaneseq
          %v1145 = vshrl.u32 %v1144, 7
          %v1146 = vsub.s32 1, %v1145
          %v1147 = vrot.slane %v1132, %v1146
          %v1148 = vlaneseq
          %v1149 = vshrl.u32 %v1148, 7
          %v1150 = vsub.s32 2, %v1149
          %v1151 = vrot.slane %v1132, %v1150
          %1152 = vrot.lane.b32.xlu0 %v1143, 47
          %v1153 = vpop.permute.xlu0 %1152
          %1154 = vrot.lane.b32.xlu0 %v1147, 47
          %v1155 = vpop.permute.xlu0 %1154
          %1156 = vrot.lane.b32.xlu0 %v1151, 47
          %v1157 = vpop.permute.xlu0 %1156
          %vm1158 = vcmask 384000
          %v1159 = vsel %vm1158, %v1153, %v1155
          %v1160 = vsel %vm1158, %v1155, %v1157
          %v1163 = vsel %vm1137, %v1159, 0.0
          %v1164 = vsel %vm1138, %v1160, 0.0
          %v1165 = vadd.f32 %v1017, %v1163
          %v1166 = vadd.f32 %v1018, %v1164
          %v1167 = vstv %s296
          %v1168 = vmul.f32 %v1167, %v416
          %v1169 = vadd.f32 %v1168, 0.0
          %v1170 = vstv %s345
          %v1171 = vmul.f32 %v1170, %v420
          %v1172 = vadd.f32 %v1169, %v1171
          %v1173 = vstv %s303
          %v1174 = vmul.f32 %v1173, %v416
          %1176 = vrot.lane.b32.xlu0 %v1174, 112
          %v1177 = vpop.permute.xlu0 %1176
          %v1178 = vrot.slane %v1177, 1
          %v1179 = vsel %vm430, %v1177, %v1178
          %v1181 = vadd.f32 %v1172, %v1179
          %v1182 = vstv %s352
          %v1183 = vmul.f32 %v1182, %v420
          %1185 = vrot.lane.b32.xlu0 %v1183, 112
          %v1186 = vpop.permute.xlu0 %1185
          %v1187 = vrot.slane %v1186, 1
          %v1188 = vsel %vm430, %v1186, %v1187
          %v1190 = vadd.f32 %v1181, %v1188
          %v1191 = vstv %s310
          %v1192 = vmul.f32 %v1191, %v416
          %1194 = vrot.lane.b32.xlu0 %v1192, 96
          %v1195 = vpop.permute.xlu0 %1194
          %v1196 = vrot.slane %v1195, 1
          %v1197 = vsel %vm449, %v1195, %v1196
          %v1199 = vadd.f32 %v1190, %v1197
          %v1200 = vstv %s359
          %v1201 = vmul.f32 %v1200, %v420
          %1203 = vrot.lane.b32.xlu0 %v1201, 96
          %v1204 = vpop.permute.xlu0 %1203
          %v1205 = vrot.slane %v1204, 1
          %v1206 = vsel %vm449, %v1204, %v1205
          %v1208 = vadd.f32 %v1199, %v1206
          %v1209 = vstv %s317
          %v1210 = vmul.f32 %v1209, %v481
          %1212 = vrot.lane.b32.xlu0 %v1210, 80
          %v1213 = vpop.permute.xlu0 %1212
          %v1214 = vrot.slane %v1213, 7
          %v1215 = vsel %vm468, %v1214, %v1213
          %v1217 = vadd.f32 %v1208, %v1215
          %v1218 = vstv %s366
          %v1219 = vmul.f32 %v1218, %v492
          %1221 = vrot.lane.b32.xlu0 %v1219, 80
          %v1222 = vpop.permute.xlu0 %1221
          %v1223 = vrot.slane %v1222, 7
          %v1224 = vsel %vm468, %v1223, %v1222
          %v1226 = vadd.f32 %v1217, %v1224
          %v1227 = vstv %s324
          %v1228 = vmul.f32 %v1227, %v481
          %1230 = vrot.lane.b32.xlu0 %v1228, 64
          %v1231 = vpop.permute.xlu0 %1230
          %v1232 = vrot.slane %v1231, 7
          %v1233 = vsel %vm488, %v1232, %v1231
          %v1235 = vadd.f32 %v1226, %v1233
          %v1236 = vstv %s373
          %v1237 = vmul.f32 %v1236, %v492
          %1239 = vrot.lane.b32.xlu0 %v1237, 64
          %v1240 = vpop.permute.xlu0 %1239
          %v1241 = vrot.slane %v1240, 7
          %v1242 = vsel %vm488, %v1241, %v1240
          %v1244 = vadd.f32 %v1235, %v1242
          %v1245 = vstv %s331
          %v1246 = vmul.f32 %v1245, %v481
          %1248 = vrot.lane.b32.xlu0 %v1246, 48
          %v1249 = vpop.permute.xlu0 %1248
          %v1250 = vrot.slane %v1249, 7
          %v1251 = vsel %vm508, %v1250, %v1249
          %v1253 = vadd.f32 %v1244, %v1251
          %v1254 = vstv %s380
          %v1255 = vmul.f32 %v1254, %v492
          %1257 = vrot.lane.b32.xlu0 %v1255, 48
          %v1258 = vpop.permute.xlu0 %1257
          %v1259 = vrot.slane %v1258, 7
          %v1260 = vsel %vm508, %v1259, %v1258
          %v1262 = vadd.f32 %v1253, %v1260
          %v1263 = vstv %s338
          %v1264 = vmul.f32 %v1263, %v481
          %1266 = vrot.lane.b32.xlu0 %v1264, 32
          %v1267 = vpop.permute.xlu0 %1266
          %v1268 = vrot.slane %v1267, 7
          %v1269 = vsel %vm527, %v1268, %v1267
          %v1271 = vadd.f32 %v1262, %v1269
          %v1272 = vstv %s387
          %v1273 = vmul.f32 %v1272, %v492
          %1275 = vrot.lane.b32.xlu0 %v1273, 32
          %v1276 = vpop.permute.xlu0 %1275
          %v1277 = vrot.slane %v1276, 7
          %v1278 = vsel %vm527, %v1277, %v1276
          %v1280 = vadd.f32 %v1271, %v1278
          %vm1281 = vcmp.ge.s32.totalorder %v414, 4294967294
          %vm1282 = vcmp.ge.s32.totalorder %v415, 4294967294
          %vm1283 = vcmp.lt.s32.totalorder %v414, 14
          %vm1284 = vcmp.lt.s32.totalorder %v415, 14
          %vm1285 = vmand %vm1281, %vm1283
          %vm1286 = vmand %vm1282, %vm1284
          %v1288 = vlaneseq
          %v1289 = vshrl.u32 %v1288, 7
          %v1290 = vsub.s32 0, %v1289
          %v1291 = vrot.slane %v1280, %v1290
          %v1292 = vlaneseq
          %v1293 = vshrl.u32 %v1292, 7
          %v1294 = vsub.s32 1, %v1293
          %v1295 = vrot.slane %v1280, %v1294
          %v1296 = vlaneseq
          %v1297 = vshrl.u32 %v1296, 7
          %v1298 = vsub.s32 2, %v1297
          %v1299 = vrot.slane %v1280, %v1298
          %1300 = vrot.lane.b32.xlu0 %v1291, 46
          %v1301 = vpop.permute.xlu0 %1300
          %1302 = vrot.lane.b32.xlu0 %v1295, 46
          %v1303 = vpop.permute.xlu0 %1302
          %1304 = vrot.lane.b32.xlu0 %v1299, 46
          %v1305 = vpop.permute.xlu0 %1304
          %vm1306 = vcmask 375808
          %v1307 = vsel %vm1306, %v1301, %v1303
          %v1308 = vsel %vm1306, %v1303, %v1305
          %v1311 = vsel %vm1285, %v1307, 0.0
          %v1312 = vsel %vm1286, %v1308, 0.0
          %v1313 = vadd.f32 %v1165, %v1311
          %v1314 = vadd.f32 %v1166, %v1312
          %v1315 = vstv %s297
          %v1316 = vmul.f32 %v1315, %v416
          %v1317 = vadd.f32 %v1316, 0.0
          %v1318 = vstv %s346
          %v1319 = vmul.f32 %v1318, %v420
          %v1320 = vadd.f32 %v1317, %v1319
          %v1321 = vstv %s304
          %v1322 = vmul.f32 %v1321, %v416
          %1324 = vrot.lane.b32.xlu0 %v1322, 112
          %v1325 = vpop.permute.xlu0 %1324
          %v1326 = vrot.slane %v1325, 1
          %v1327 = vsel %vm430, %v1325, %v1326
          %v1329 = vadd.f32 %v1320, %v1327
          %v1330 = vstv %s353
          %v1331 = vmul.f32 %v1330, %v420
          %1333 = vrot.lane.b32.xlu0 %v1331, 112
          %v1334 = vpop.permute.xlu0 %1333
          %v1335 = vrot.slane %v1334, 1
          %v1336 = vsel %vm430, %v1334, %v1335
          %v1338 = vadd.f32 %v1329, %v1336
          %v1339 = vstv %s311
          %v1340 = vmul.f32 %v1339, %v416
          %1342 = vrot.lane.b32.xlu0 %v1340, 96
          %v1343 = vpop.permute.xlu0 %1342
          %v1344 = vrot.slane %v1343, 1
          %v1345 = vsel %vm449, %v1343, %v1344
          %v1347 = vadd.f32 %v1338, %v1345
          %v1348 = vstv %s360
          %v1349 = vmul.f32 %v1348, %v420
          %1351 = vrot.lane.b32.xlu0 %v1349, 96
          %v1352 = vpop.permute.xlu0 %1351
          %v1353 = vrot.slane %v1352, 1
          %v1354 = vsel %vm449, %v1352, %v1353
          %v1356 = vadd.f32 %v1347, %v1354
          %v1357 = vstv %s318
          %v1358 = vmul.f32 %v1357, %v481
          %1360 = vrot.lane.b32.xlu0 %v1358, 80
          %v1361 = vpop.permute.xlu0 %1360
          %v1362 = vrot.slane %v1361, 7
          %v1363 = vsel %vm468, %v1362, %v1361
          %v1365 = vadd.f32 %v1356, %v1363
          %v1366 = vstv %s367
          %v1367 = vmul.f32 %v1366, %v492
          %1369 = vrot.lane.b32.xlu0 %v1367, 80
          %v1370 = vpop.permute.xlu0 %1369
          %v1371 = vrot.slane %v1370, 7
          %v1372 = vsel %vm468, %v1371, %v1370
          %v1374 = vadd.f32 %v1365, %v1372
          %v1375 = vstv %s325
          %v1376 = vmul.f32 %v1375, %v481
          %1378 = vrot.lane.b32.xlu0 %v1376, 64
          %v1379 = vpop.permute.xlu0 %1378
          %v1380 = vrot.slane %v1379, 7
          %v1381 = vsel %vm488, %v1380, %v1379
          %v1383 = vadd.f32 %v1374, %v1381
          %v1384 = vstv %s374
          %v1385 = vmul.f32 %v1384, %v492
          %1387 = vrot.lane.b32.xlu0 %v1385, 64
          %v1388 = vpop.permute.xlu0 %1387
          %v1389 = vrot.slane %v1388, 7
          %v1390 = vsel %vm488, %v1389, %v1388
          %v1392 = vadd.f32 %v1383, %v1390
          %v1393 = vstv %s332
          %v1394 = vmul.f32 %v1393, %v481
          %1396 = vrot.lane.b32.xlu0 %v1394, 48
          %v1397 = vpop.permute.xlu0 %1396
          %v1398 = vrot.slane %v1397, 7
          %v1399 = vsel %vm508, %v1398, %v1397
          %v1401 = vadd.f32 %v1392, %v1399
          %v1402 = vstv %s381
          %v1403 = vmul.f32 %v1402, %v492
          %1405 = vrot.lane.b32.xlu0 %v1403, 48
          %v1406 = vpop.permute.xlu0 %1405
          %v1407 = vrot.slane %v1406, 7
          %v1408 = vsel %vm508, %v1407, %v1406
          %v1410 = vadd.f32 %v1401, %v1408
          %v1411 = vstv %s339
          %v1412 = vmul.f32 %v1411, %v481
          %1414 = vrot.lane.b32.xlu0 %v1412, 32
          %v1415 = vpop.permute.xlu0 %1414
          %v1416 = vrot.slane %v1415, 7
          %v1417 = vsel %vm527, %v1416, %v1415
          %v1419 = vadd.f32 %v1410, %v1417
          %v1420 = vstv %s388
          %v1421 = vmul.f32 %v1420, %v492
          %1423 = vrot.lane.b32.xlu0 %v1421, 32
          %v1424 = vpop.permute.xlu0 %1423
          %v1425 = vrot.slane %v1424, 7
          %v1426 = vsel %vm527, %v1425, %v1424
          %v1428 = vadd.f32 %v1419, %v1426
          %vm1429 = vcmp.ge.s32.totalorder %v414, 4294967293
          %vm1430 = vcmp.ge.s32.totalorder %v415, 4294967293
          %vm1431 = vcmp.lt.s32.totalorder %v414, 13
          %vm1432 = vcmp.lt.s32.totalorder %v415, 13
          %vm1433 = vmand %vm1429, %vm1431
          %vm1434 = vmand %vm1430, %vm1432
          %v1436 = vlaneseq
          %v1437 = vshrl.u32 %v1436, 7
          %v1438 = vsub.s32 0, %v1437
          %v1439 = vrot.slane %v1428, %v1438
          %v1440 = vlaneseq
          %v1441 = vshrl.u32 %v1440, 7
          %v1442 = vsub.s32 1, %v1441
          %v1443 = vrot.slane %v1428, %v1442
          %v1444 = vlaneseq
          %v1445 = vshrl.u32 %v1444, 7
          %v1446 = vsub.s32 2, %v1445
          %v1447 = vrot.slane %v1428, %v1446
          %1448 = vrot.lane.b32.xlu0 %v1439, 45
          %v1449 = vpop.permute.xlu0 %1448
          %1450 = vrot.lane.b32.xlu0 %v1443, 45
          %v1451 = vpop.permute.xlu0 %1450
          %1452 = vrot.lane.b32.xlu0 %v1447, 45
          %v1453 = vpop.permute.xlu0 %1452
          %vm1454 = vcmask 367616
          %v1455 = vsel %vm1454, %v1449, %v1451
          %v1456 = vsel %vm1454, %v1451, %v1453
          %v1459 = vsel %vm1433, %v1455, 0.0
          %v1460 = vsel %vm1434, %v1456, 0.0
          %v1461 = vadd.f32 %v1313, %v1459
          %v1462 = vadd.f32 %v1314, %v1460
          %v1463 = vsub.f32 0.0, %v1461
          %v1464 = vsub.f32 0.0, %v1462
          %v1465 = vmul.f32 %v1463, 1.442695
          %v1466 = vpow.pop %v1465
          %v1467 = vmul.f32 %v1464, 1.442695
          %v1468 = vpow.pop %v1467
          %v1469 = vadd.f32 %v1466, 1.0
          %v1470 = vadd.f32 %v1468, 1.0
          %v1471 = vrcp.pop %v1469
          %v1472 = vmul.f32 1.0, %v1471
          %v1473 = vrcp.pop %v1470
          %v1474 = vmul.f32 1.0, %v1473
          %v1477 = vcombine.low %v1472, %v1474
          %v1479 = vunpack.c.l.s4 1966171168
          %v1480 = vunpack.c.0.s8 %v1479
          %v1481 = vlaneseq
          %v1482 = vshrl.u32 %v1481, 7
          %v1483 = vsub.s32 %v1480, %v1482
          %v1484 = vrot.slane %v1477, %v1483
          %v1486 = vunpack.c.l.s4 1966171168
          %v1487 = vunpack.c.0.s8 %v1486
          %v1488 = vlaneseq
          %v1489 = vshrl.u32 %v1488, 7
          %v1490 = vsub.s32 %v1487, %v1489
          %v1491 = vrot.slane %v1484, %v1490
          %1493 = vst.msk [vmem:[%s189] sm:$0x3] %vm242, %v1491
        $region44: #{tpu_custom_call.1} parent=27 // pred_fallthru
          _
        %s1494 = sand.u32 %s89, 1
        %s1495 = scalar_lea.sflag [#allocation8], %s1494
        %s1496 = sand.u32 %s89, 1
        %s1497 = smul.addr %s1496, 2
        %s1498 = scalar_lea.vmem [#allocation11], %s1497
        // Predicated region
        $region45: #{tpu_custom_call.1} parent=27 // pred_check
          %p1499 = pneg %p99
        $region46: #{tpu_custom_call.1} parent=27 // pred_check_branch
          %1501 = sbr.rel (%p1499) target = $region48
        $region47: #{tpu_custom_call.1} parent=27 // pred_region
          %s1503 = ssub.s32 32, 32
          %1504 = vsyncadd %s1495, %s1503
          %s1505 = smul.addr %s24, 2
          %s1506 = smul.addr %s1505, 16
          %s1507 = scalar_lea.hbm %s2, %s1506
          %s1509 = sshll.u32 %s1498, 4
          %s1510 = int_to_ptr.vmem [resolvable:$true] %s1509
          %1512 = dma.vmem_to_hbm [thread:$0]  %s1510, 32, %s1507, %s1495
        $region48: #{tpu_custom_call.1} parent=27 // pred_fallthru
          _
      $region28: #{tpu_custom_call.1} parent=5 // pred_fallthru
        _
      %p1513 = scmp.le.s32.totalorder 2, %s15
      // Predicated region
      $region49: #{tpu_custom_call.1} parent=5 // pred_check
        %p1514 = pneg %p1513
      $region50: #{tpu_custom_call.1} parent=5 // pred_check_branch
        %1516 = sbr.rel (%p1514) target = $region52
      $region51: #{tpu_custom_call.1} parent=5 // pred_region
        %s1517 = ssub.s32 %s15, 2
        // Predicated region
        $region53: #{tpu_custom_call.1} parent=51 // pred_check
          %p1518 = pneg %p105
        $region54: #{tpu_custom_call.1} parent=51 // pred_check_branch
          %1520 = sbr.rel (%p1518) target = $region56
        $region55: #{tpu_custom_call.1} parent=51 // pred_region
          %s1521 = sand.u32 %s90, 1
          %s1522 = scalar_lea.sflag [#allocation8], %s1521
          %s1523 = sand.u32 %s90, 1
          %s1524 = smul.addr %s1523, 2
          %s1525 = scalar_lea.vmem [#allocation11], %s1524
          %1526 = dma.done %s1522, 32
        $region56: #{tpu_custom_call.1} parent=51 // pred_fallthru
          _
      $region52: #{tpu_custom_call.1} parent=5 // pred_fallthru
        _
    $region6: #{tpu_custom_call.1} parent=1 // loop_footer
      %s19 = sadd.s32 1, %s15
    $region7: #{tpu_custom_call.1} parent=1 // loop_footer_branch
      %14 = sbr.rel target = $region3
    $region8: #{tpu_custom_call.1} parent=1 // loop_exit
      _
    %1527 = vsyncpa [#allocation7], 1
    %s1528 = scalar_lea.sflag [#allocation7], 1
    %1529 = vsyncpa %s1528, 1
    %1530 = vsyncpa [#allocation8], 1
    %s1531 = scalar_lea.sflag [#allocation8], 1
    %1532 = vsyncpa %s1531, 1
    %1533 = vsyncpa [#allocation9], 1
    %s1534 = scalar_lea.sflag [#allocation9], 1
    %1535 = vsyncpa %s1534, 1

</llo_original>
